<compile_context>
chip_gen: v6e
topology: v6e:2x2x1
jax: 0.10.0
libtpu: 0.0.40
codegen_flags: <defaults>
</compile_context>

<pallas_src>
import jax
import jax.numpy as jnp
from jax import lax
from jax.experimental import pallas as pl
from jax.experimental.pallas import tpu as pltpu


def _round_up(x, m):
    return ((x + m - 1) // m) * m


def dfia_metric_kernel(scale_ref, spt_ref, qry_ref, w_ref, b_ref, out_ref, rhs_ref):
    # scale_ref: (1,) f32 in SMEM (scalar prefetch)
    # spt_ref:   (1, way, C, HW)   qry_ref: (1, nq, C, HW)
    # w_ref:     (num_class, C)    b_ref:   (1, R)  (zeros over logit cols)
    # out_ref:   (1, nq, R)        rhs_ref: (R, C) VMEM scratch
    way = spt_ref.shape[1]
    num_class = w_ref.shape[0]
    R = rhs_ref.shape[0]
    pad_way = _round_up(way, 8)          # sublane-aligned boundary for fc rows
    eps = jnp.float32(1e-8)

    # Native NCHW layout (HW on lanes): spatial pooling is a lane reduce; no
    # wrapper-side transpose / extra HBM pass.  Upcast in-kernel (v5e has no
    # bf16 VPU; bf16 inputs still halve the HBM->VMEM traffic).
    spt = spt_ref[0].astype(jnp.float32)                 # (way, C, HW)
    qry = qry_ref[0].astype(jnp.float32)                 # (nq,  C, HW)
    spt_pooled = jnp.mean(spt, axis=-1)                  # (way, C)
    qry_pooled = jnp.mean(qry, axis=-1)                  # (nq,  C)

    # Channel-centering on the tiny pooled vectors (exact by linearity of the
    # mean: mean_HW(x - mean_C(x)) == mean_HW(x) - mean_C(mean_HW(x))).
    spt_c = spt_pooled - jnp.mean(spt_pooled, axis=-1, keepdims=True)   # (way, C)
    qry_c = qry_pooled - jnp.mean(qry_pooled, axis=-1, keepdims=True)   # (nq,  C)

    # 1 / max(||.||, eps), per vector (F.cosine_similarity clamps each norm).
    # EUP approx reciprocal + one Newton-Raphson step: ~1e-7 relative error.
    s_norm = jnp.maximum(jnp.sqrt(jnp.sum(spt_c * spt_c, -1, keepdims=True)), eps)
    q_norm = jnp.maximum(jnp.sqrt(jnp.sum(qry_c * qry_c, -1, keepdims=True)), eps)
    rs = pl.reciprocal(s_norm, approx=True)
    rq = pl.reciprocal(q_norm, approx=True)
    inv_sn = rs * (jnp.float32(2.0) - s_norm * rs)       # (way, 1)
    inv_qn = rq * (jnp.float32(2.0) - q_norm * rq)       # (nq, 1)

    # Assemble the RHS in scratch with tile-aligned stores (no concat at a
    # mid-tile sublane offset):
    #   rows [0:way)                 unit support directions, scale folded in
    #   rows [pad_way:pad_way+nc)    fc weight rows (sublane-aligned offset)
    #   remaining rows               zeros (their columns are sliced away)
    scale = scale_ref[0]
    rhs_ref[...] = jnp.zeros_like(rhs_ref)
    rhs_ref[0:way, :] = spt_c * (inv_sn * scale)
    rhs_ref[pad_way:pad_way + num_class, :] = w_ref[...].astype(jnp.float32)

    # Single MXU call, contracting C.  Using qry_pooled (not qry_c) for the
    # logit columns is exact in real arithmetic because each normalized
    # support row sums to 0 over C; fp32 error is O(C*ulp), negligible at C=64.
    fused = lax.dot_general(
        qry_pooled, rhs_ref[...],
        dimension_numbers=(((1,), (1,)), ((), ())),
        preferred_element_type=jnp.float32)              # (nq, R)

    # Query-norm on the logit columns, +bias on the fc columns, one FMA on the
    # lane-dense (nq, R) slab.
    col = lax.broadcasted_iota(jnp.int32, (1, R), 1)
    mult = jnp.where(col < pad_way, inv_qn, jnp.float32(1.0))     # (nq, R)
    out_ref[0] = fused * mult + b_ref[...]


def dfia_metric(token_support, token_query, fc_w, fc_b, scale):
    """DFIA.metric forward (mode='base', training=True).

    token_support: (way, C, H, W) or (E, way, C, H, W)
    token_query:   (nq,  C, H, W) or (E, nq,  C, H, W)
    fc_w: (num_class, C) (nn.Linear layout), fc_b: (num_class,), scale: scalar.
    Returns (logits, fc_out) of shapes ((E,) nq, way) and ((E,) nq, num_class).
    """
    single = token_support.ndim == 4
    if single:
        token_support = token_support[None]
        token_query = token_query[None]
    E, way, C, H, W = token_support.shape
    nq = token_query.shape[1]
    num_class = fc_w.shape[0]
    HW = H * W
    pad_way = _round_up(way, 8)
    R = 128                                   # lane-dense fused output columns
    assert pad_way + num_class <= R, "tile the class dim for large num_class"
    # TODO(synk): for ResNet-scale features (C=640, nq~75) tile nq / episodes
    # with explicit vmem_limit_bytes (v7x only has 64 MiB physical VMEM).

    # Free reshapes only — no transpose, no dtype cast of the big feature maps.
    spt = token_support.reshape(E, way, C, HW)
    qry = token_query.reshape(E, nq, C, HW)
    b_pad = jnp.zeros((1, R), jnp.float32)
    b_pad = b_pad.at[0, pad_way:pad_way + num_class].set(fc_b.astype(jnp.float32))
    sc = jnp.asarray(scale, jnp.float32).reshape(1)      # scalar prefetch (SMEM)

    grid_spec = pltpu.PrefetchScalarGridSpec(
        num_scalar_prefetch=1,
        grid=(E,),
        in_specs=[
            pl.BlockSpec((1, way, C, HW), lambda e, s: (e, 0, 0, 0)),   # support
            pl.BlockSpec((1, nq, C, HW), lambda e, s: (e, 0, 0, 0)),    # query
            pl.BlockSpec((num_class, C), lambda e, s: (0, 0)),          # fc weight
            pl.BlockSpec((1, R), lambda e, s: (0, 0)),                  # padded bias
        ],
        out_specs=pl.BlockSpec((1, nq, R), lambda e, s: (e, 0, 0)),
        scratch_shapes=[pltpu.VMEM((R, C), jnp.float32)],
    )

    fused = pl.pallas_call(
        dfia_metric_kernel,
        out_shape=jax.ShapeDtypeStruct((E, nq, R), jnp.float32),
        grid_spec=grid_spec,
        compiler_params=pltpu.CompilerParams(
            dimension_semantics=("parallel",)),           # shard episodes across TCs
    )(sc, spt, qry, fc_w, b_pad)

    logits = fused[:, :, :way]
    fc_out = fused[:, :, pad_way:pad_way + num_class]
    if single:
        logits, fc_out = logits[0], fc_out[0]
    return logits, fc_out


def dfia_metric_ref(token_support, token_query, fc_w, fc_b, scale):
    """Pure-JAX single-episode reference mirroring the PyTorch forward."""
    eps = 1e-8
    qry_pooled = token_query.mean(axis=(-1, -2))                       # (nq, C)
    spt_n = token_support - token_support.mean(axis=1, keepdims=True)  # center over C
    qry_n = token_query - token_query.mean(axis=1, keepdims=True)
    spt_p = spt_n.mean(axis=(-1, -2))                                  # (way, C)
    qry_p = qry_n.mean(axis=(-1, -2))                                  # (nq, C)
    spt_u = spt_p / jnp.maximum(jnp.linalg.norm(spt_p, axis=-1, keepdims=True), eps)
    qry_u = qry_p / jnp.maximum(jnp.linalg.norm(qry_p, axis=-1, keepdims=True), eps)
    logits = (qry_u @ spt_u.T) * scale
    fc_out = qry_pooled @ fc_w.T + fc_b
    return logits, fc_out


if __name__ == "__main__":
    # ConvNet-branch shapes: C=64 features, 5x5 map, 4-way episodes, 8 queries,
    # 16 base classes; E=6 episodes batched under the parallel grid axis.
    key = jax.random.PRNGKey(0)
    k1, k2, k3, k4 = jax.random.split(key, 4)

    E, way, nq, C, H, W, num_class = 6, 4, 8, 64, 5, 5, 16

    token_support = jax.random.normal(k1, (E, way, C, H, W), jnp.float32)
    token_query = jax.random.normal(k2, (E, nq, C, H, W), jnp.float32)

    # Deterministic synthetic params: fc = nn.Linear(64, num_class); scale init 1.0.
    bound = 1.0 / (C ** 0.5)
    fc_w = jax.random.uniform(k3, (num_class, C), jnp.float32, -bound, bound)
    fc_b = jax.random.uniform(k4, (num_class,), jnp.float32, -bound, bound)
    scale = jnp.float32(1.0)

    logits, fc_out = dfia_metric(token_support, token_query, fc_w, fc_b, scale)
    jax.block_until_ready((logits, fc_out))
    assert logits.shape == (E, nq, way) and fc_out.shape == (E, nq, num_class)

    for e in range(E):
        ref_logits, ref_fc = dfia_metric_ref(token_support[e], token_query[e],
                                             fc_w, fc_b, scale)
        assert jnp.allclose(logits[e], ref_logits, atol=1e-5, rtol=1e-5)
        assert jnp.allclose(fc_out[e], ref_fc, atol=1e-5, rtol=1e-5)

    # Single-episode API (matches the original per-episode module forward).
    l1, f1 = dfia_metric(token_support[0], token_query[0], fc_w, fc_b, scale)
    jax.block_until_ready((l1, f1))
    assert jnp.allclose(l1, logits[0], atol=1e-6, rtol=1e-6)
    assert jnp.allclose(f1, fc_out[0], atol=1e-6, rtol=1e-6)

    print("KERNEL_OK")
</pallas_src>

<mosaic_0001>
module attributes {stable_mosaic.version = 11 : i64} {
  func.func @dfia_metric_kernel(%arg0: i32, %arg1: memref<1xf32, #tpu.memory_space<smem>>, %arg2: memref<1x4x64x25xf32, #tpu.memory_space<vmem>>, %arg3: memref<1x8x64x25xf32, #tpu.memory_space<vmem>>, %arg4: memref<16x64xf32, #tpu.memory_space<vmem>>, %arg5: memref<1x128xf32, #tpu.memory_space<vmem>>, %arg6: memref<1x8x128xf32, #tpu.memory_space<vmem>>, %arg7: memref<128x64xf32, #tpu.memory_space<vmem>>) attributes {dimension_semantics = [#tpu.dimension_semantics<parallel>], iteration_bounds = array<i64: 6>, scalar_prefetch = 1 : i64, scratch_operands = 1 : i64, tpu.core_type = #tpu.core_type<tc>, window_params = [{transform_indices = @transform_0, window_bounds = array<i64: 1, 4, 64, 25>}, {transform_indices = @transform_1, window_bounds = array<i64: 1, 8, 64, 25>}, {pipeline_mode = #tpu.pipeline_mode<synchronous>, transform_indices = @transform_2, window_bounds = array<i64: 16, 64>}, {pipeline_mode = #tpu.pipeline_mode<synchronous>, transform_indices = @transform_3, window_bounds = array<i64: 1, 128>}, {transform_indices = @transform_4, window_bounds = array<i64: 1, 8, 128>}]} {
    %c0 = arith.constant 0 : index
    %c0_0 = arith.constant 0 : index
    %c0_1 = arith.constant 0 : index
    %c0_2 = arith.constant 0 : index
    %0 = vector.load %arg2[%c0, %c0_0, %c0_1, %c0_2] : memref<1x4x64x25xf32, #tpu.memory_space<vmem>>, vector<1x4x64x25xf32>
    %1 = vector.shape_cast %0 : vector<1x4x64x25xf32> to vector<4x64x25xf32>
    %c0_3 = arith.constant 0 : index
    %c0_4 = arith.constant 0 : index
    %c0_5 = arith.constant 0 : index
    %c0_6 = arith.constant 0 : index
    %2 = vector.load %arg3[%c0_3, %c0_4, %c0_5, %c0_6] : memref<1x8x64x25xf32, #tpu.memory_space<vmem>>, vector<1x8x64x25xf32>
    %3 = vector.shape_cast %2 : vector<1x8x64x25xf32> to vector<8x64x25xf32>
    %cst = arith.constant dense<0.000000e+00> : vector<4x64xf32>
    %4 = vector.multi_reduction <add>, %1, %cst [2] : vector<4x64x25xf32> to vector<4x64xf32>
    %cst_7 = arith.constant 2.500000e+01 : f32
    %5 = vector.broadcast %cst_7 : f32 to vector<4x64xf32>
    %6 = arith.divf %4, %5 : vector<4x64xf32>
    %cst_8 = arith.constant dense<0.000000e+00> : vector<8x64xf32>
    %7 = vector.multi_reduction <add>, %3, %cst_8 [2] : vector<8x64x25xf32> to vector<8x64xf32>
    %cst_9 = arith.constant 2.500000e+01 : f32
    %8 = vector.broadcast %cst_9 : f32 to vector<8x64xf32>
    %9 = arith.divf %7, %8 : vector<8x64xf32>
    %cst_10 = arith.constant dense<0.000000e+00> : vector<4xf32>
    %10 = vector.multi_reduction <add>, %6, %cst_10 [1] : vector<4x64xf32> to vector<4xf32>
    %11 = vector.shape_cast %10 : vector<4xf32> to vector<4x1xf32>
    %cst_11 = arith.constant 6.400000e+01 : f32
    %12 = vector.broadcast %cst_11 : f32 to vector<4x1xf32>
    %13 = arith.divf %11, %12 : vector<4x1xf32>
    %14 = vector.broadcast %13 : vector<4x1xf32> to vector<4x64xf32>
    %15 = arith.subf %6, %14 : vector<4x64xf32>
    %cst_12 = arith.constant dense<0.000000e+00> : vector<8xf32>
    %16 = vector.multi_reduction <add>, %9, %cst_12 [1] : vector<8x64xf32> to vector<8xf32>
    %17 = vector.shape_cast %16 : vector<8xf32> to vector<8x1xf32>
    %cst_13 = arith.constant 6.400000e+01 : f32
    %18 = vector.broadcast %cst_13 : f32 to vector<8x1xf32>
    %19 = arith.divf %17, %18 : vector<8x1xf32>
    %20 = vector.broadcast %19 : vector<8x1xf32> to vector<8x64xf32>
    %21 = arith.subf %9, %20 : vector<8x64xf32>
    %22 = arith.mulf %15, %15 : vector<4x64xf32>
    %cst_14 = arith.constant dense<0.000000e+00> : vector<4xf32>
    %23 = vector.multi_reduction <add>, %22, %cst_14 [1] : vector<4x64xf32> to vector<4xf32>
    %24 = vector.shape_cast %23 : vector<4xf32> to vector<4x1xf32>
    %25 = math.sqrt %24 : vector<4x1xf32>
    %cst_15 = arith.constant 9.99999993E-9 : f32
    %26 = vector.broadcast %cst_15 : f32 to vector<4x1xf32>
    %27 = arith.maximumf %25, %26 : vector<4x1xf32>
    %28 = arith.mulf %21, %21 : vector<8x64xf32>
    %cst_16 = arith.constant dense<0.000000e+00> : vector<8xf32>
    %29 = vector.multi_reduction <add>, %28, %cst_16 [1] : vector<8x64xf32> to vector<8xf32>
    %30 = vector.shape_cast %29 : vector<8xf32> to vector<8x1xf32>
    %31 = math.sqrt %30 : vector<8x1xf32>
    %cst_17 = arith.constant 9.99999993E-9 : f32
    %32 = vector.broadcast %cst_17 : f32 to vector<8x1xf32>
    %33 = arith.maximumf %31, %32 : vector<8x1xf32>
    %34 = tpu.reciprocal %27 {approx = true} : vector<4x1xf32> -> vector<4x1xf32>
    %35 = tpu.reciprocal %33 {approx = true} : vector<8x1xf32> -> vector<8x1xf32>
    %36 = arith.mulf %27, %34 : vector<4x1xf32>
    %cst_18 = arith.constant 2.000000e+00 : f32
    %37 = vector.broadcast %cst_18 : f32 to vector<4x1xf32>
    %38 = arith.subf %37, %36 : vector<4x1xf32>
    %39 = arith.mulf %34, %38 : vector<4x1xf32>
    %40 = arith.mulf %33, %35 : vector<8x1xf32>
    %cst_19 = arith.constant 2.000000e+00 : f32
    %41 = vector.broadcast %cst_19 : f32 to vector<8x1xf32>
    %42 = arith.subf %41, %40 : vector<8x1xf32>
    %43 = arith.mulf %35, %42 : vector<8x1xf32>
    %c0_20 = arith.constant 0 : index
    %44 = memref.load %arg1[%c0_20] : memref<1xf32, #tpu.memory_space<smem>>
    %cst_21 = arith.constant 0.000000e+00 : f32
    %45 = vector.broadcast %cst_21 : f32 to vector<128x64xf32>
    %c0_22 = arith.constant 0 : index
    %c0_23 = arith.constant 0 : index
    %46 = vector.load %arg7[%c0_22, %c0_23] : memref<128x64xf32, #tpu.memory_space<vmem>>, vector<128x64xf32>
    tpu.vector_store %arg7[%c0_22, %c0_23], %45 {strides = array<i32>} : memref<128x64xf32, #tpu.memory_space<vmem>>, vector<128x64xf32>,
    %47 = vector.broadcast %44 : f32 to vector<4x1xf32>
    %48 = arith.mulf %39, %47 : vector<4x1xf32>
    %49 = vector.broadcast %48 : vector<4x1xf32> to vector<4x64xf32>
    %50 = arith.mulf %15, %49 : vector<4x64xf32>
    %c0_24 = arith.constant 0 : index
    %c0_25 = arith.constant 0 : index
    %51 = vector.load %arg7[%c0_24, %c0_25] : memref<128x64xf32, #tpu.memory_space<vmem>>, vector<4x64xf32>
    tpu.vector_store %arg7[%c0_24, %c0_25], %50 {strides = array<i32>} : memref<128x64xf32, #tpu.memory_space<vmem>>, vector<4x64xf32>,
    %c0_26 = arith.constant 0 : index
    %c0_27 = arith.constant 0 : index
    %52 = vector.load %arg4[%c0_26, %c0_27] : memref<16x64xf32, #tpu.memory_space<vmem>>, vector<16x64xf32>
    %c8 = arith.constant 8 : index
    %c0_28 = arith.constant 0 : index
    %53 = vector.load %arg7[%c8, %c0_28] : memref<128x64xf32, #tpu.memory_space<vmem>>, vector<16x64xf32>
    tpu.vector_store %arg7[%c8, %c0_28], %52 {strides = array<i32>} : memref<128x64xf32, #tpu.memory_space<vmem>>, vector<16x64xf32>,
    %c0_29 = arith.constant 0 : index
    %c0_30 = arith.constant 0 : index
    %54 = vector.load %arg7[%c0_29, %c0_30] : memref<128x64xf32, #tpu.memory_space<vmem>>, vector<128x64xf32>
    %cst_31 = arith.constant dense<0.000000e+00> : vector<8x128xf32>
    %55 = tpu.matmul %9, %54, %cst_31 {dimension_numbers = #tpu.dot_dimension_numbers<[1], [1], [0], [0], [0, 0, 1, 0], [], []>} : vector<8x64xf32>, vector<128x64xf32>, vector<8x128xf32> -> vector<8x128xf32>
    %56 = tpu.iota {dimensions = array<i32: 1>} : vector<1x128xi32>
    %c8_i32 = arith.constant 8 : i32
    %57 = vector.broadcast %c8_i32 : i32 to vector<1x128xi32>
    %58 = arith.cmpi slt, %56, %57 : vector<1x128xi32>
    %cst_32 = arith.constant 1.000000e+00 : f32
    %59 = vector.shape_cast %58 : vector<1x128xi1> to vector<1x128xi1>
    %60 = vector.broadcast %59 : vector<1x128xi1> to vector<8x128xi1>
    %61 = vector.shape_cast %43 : vector<8x1xf32> to vector<8x1xf32>
    %62 = vector.broadcast %61 : vector<8x1xf32> to vector<8x128xf32>
    %63 = vector.broadcast %cst_32 : f32 to vector<8x128xf32>
    %64 = arith.select %60, %62, %63 : vector<8x128xi1>, vector<8x128xf32>
    %65 = arith.mulf %55, %64 : vector<8x128xf32>
    %c0_33 = arith.constant 0 : index
    %c0_34 = arith.constant 0 : index
    %66 = vector.load %arg5[%c0_33, %c0_34] : memref<1x128xf32, #tpu.memory_space<vmem>>, vector<1x128xf32>
    %67 = vector.broadcast %66 : vector<1x128xf32> to vector<8x128xf32>
    %68 = arith.addf %65, %67 : vector<8x128xf32>
    %c0_35 = arith.constant 0 : index
    %c0_36 = arith.constant 0 : index
    %c0_37 = arith.constant 0 : index
    %69 = vector.load %arg6[%c0_35, %c0_36, %c0_37] : memref<1x8x128xf32, #tpu.memory_space<vmem>>, vector<1x8x128xf32>
    %70 = vector.shape_cast %69 : vector<1x8x128xf32> to vector<8x128xf32>
    %71 = vector.shape_cast %68 : vector<8x128xf32> to vector<1x8x128xf32>
    tpu.vector_store %arg6[%c0_35, %c0_36, %c0_37], %71 {strides = array<i32>} : memref<1x8x128xf32, #tpu.memory_space<vmem>>, vector<1x8x128xf32>,
    return
  }
  func.func @transform_0(%arg0: i32, %arg1: memref<1xf32, #tpu.memory_space<smem>>) -> (i32, i32, i32, i32) {
    %c0_i32 = arith.constant 0 : i32
    %c0_i32_0 = arith.constant 0 : i32
    %c0_i32_1 = arith.constant 0 : i32
    %c0_i32_2 = arith.constant 0 : i32
    return %arg0, %c0_i32, %c0_i32_0, %c0_i32_1 : i32, i32, i32, i32
  }
  func.func @transform_1(%arg0: i32, %arg1: memref<1xf32, #tpu.memory_space<smem>>) -> (i32, i32, i32, i32) {
    %c0_i32 = arith.constant 0 : i32
    %c0_i32_0 = arith.constant 0 : i32
    %c0_i32_1 = arith.constant 0 : i32
    %c0_i32_2 = arith.constant 0 : i32
    return %arg0, %c0_i32, %c0_i32_0, %c0_i32_1 : i32, i32, i32, i32
  }
  func.func @transform_2(%arg0: i32, %arg1: memref<1xf32, #tpu.memory_space<smem>>) -> (i32, i32) {
    %c0_i32 = arith.constant 0 : i32
    %c0_i32_0 = arith.constant 0 : i32
    %c0_i32_1 = arith.constant 0 : i32
    return %c0_i32, %c0_i32_0 : i32, i32
  }
  func.func @transform_3(%arg0: i32, %arg1: memref<1xf32, #tpu.memory_space<smem>>) -> (i32, i32) {
    %c0_i32 = arith.constant 0 : i32
    %c0_i32_0 = arith.constant 0 : i32
    %c0_i32_1 = arith.constant 0 : i32
    return %c0_i32, %c0_i32_0 : i32, i32
  }
  func.func @transform_4(%arg0: i32, %arg1: memref<1xf32, #tpu.memory_space<smem>>) -> (i32, i32, i32) {
    %c0_i32 = arith.constant 0 : i32
    %c0_i32_0 = arith.constant 0 : i32
    %c0_i32_1 = arith.constant 0 : i32
    return %arg0, %c0_i32, %c0_i32_0 : i32, i32, i32
  }
}

</mosaic_0001>

<llo_original>
// kernel: tpu_custom_call.1
$region0: #{tpu_custom_call.1}
  #allocation0 [shape = 'u32[]', space=smem, size = 0x4, offset = 0x4, fixed_abs, tag = 'smem constant byte address 0x4 - core index']
  #allocation1 [shape = 'u32[144,128]{1,0:T(1,128)}', space=vmem, size = 0x12000, scoped, tag = 'internal scratch']
  #allocation2 [shape = 'f32[128,64]{1,0:T(8,128)}', space=vmem, size = 0x10000, scoped, tag = 'scratch operand']
  #allocation3 [shape = 's32[1]{0}', space=sflag, size = 0x4, scoped, tag = 'scoped memory for tpu_custom_call.1']
  #allocation4 [shape = 'f32[1]{0:T(128)S(6)}', space=smem, size = 0x200, scoped, tag = 'prefetched SMEM operand 0']
  %s0 = inlined_call_operand.<no memory space> [shape: f32[1], index: 0, kind: input, shape index: {}]
  %s1 = inlined_call_operand.vmem [shape: f32[6,4,64,25], index: 1, kind: input, shape index: {}]
  %s2 = inlined_call_operand.vmem [shape: f32[6,8,64,25], index: 2, kind: input, shape index: {}]
  %s3 = inlined_call_operand.vmem [shape: f32[16,64], index: 3, kind: input, shape index: {}]
  %s4 = inlined_call_operand.vmem [shape: f32[1,128], index: 4, kind: input, shape index: {}]
  %s5 = inlined_call_operand.hbm [shape: f32[6,8,128], index: 5, kind: output, shape index: {}]
  %s6 = sld [smem:[#allocation0]]
  $region49: #{tpu_custom_call.1} parent=0
    _
  %s8 = ssub.s32 1, %s6
  %s9 = scalar_select 0, %s8, %s6
  %10 = sst [smem:[#allocation4]] %s0
  $region1: #{tpu_custom_call.1} parent=0
    #allocation5 [shape = 'u8[8192]{0}', space=vmem, size = 0x2000, scoped, tag = 'output window, operand 0']
    #allocation6 [shape = 's32[2]{0}', space=sflag, size = 0x8, scoped, tag = 'scoped memory for tpu_custom_call.1']
    %11 = vsyncpa [#allocation6], 0
    %s12 = scalar_lea.sflag [#allocation6], 1
    %13 = vsyncpa %s12, 0
    loop: start=0, step=1, limit=8
    $region2: #{tpu_custom_call.1} parent=1 // loop_pre_header
      _
    $region3: #{tpu_custom_call.1} parent=1 // loop_header
      %s15 = sphi 0, %s19
      %p16 = scmp.ge.s32.totalorder %s15, 8
      %s25 = sphi 0, %s27
      %s28 = sphi 0, %s25
      %s29 = sphi 0, %s28
      %s45 = sphi 0, %s29
      %s51 = sphi 0, %s53
      %s54 = sphi 0, %s51
      %s55 = sphi 0, %s54
      %s71 = sphi 0, %s55
      %s75 = sphi 0, %s75
      %s77 = sphi 0, %s75
      %s78 = sphi 0, %s77
      %s92 = sphi 0, %s78
      %s96 = sphi 0, %s96
      %s98 = sphi 0, %s96
      %s99 = sphi 0, %s98
      %s113 = sphi 0, %s99
      %s119 = sphi 0, %s121
      %s122 = sphi 0, %s119
      %s123 = sphi 0, %s122
      %s139 = sphi 0, %s123
    $region4: #{tpu_custom_call.1} parent=1 // loop_header_branch
      %18 = sbr.rel (%p16) target = $region8
    $region5: #{tpu_custom_call.1} parent=1 // loop_body
      %s20 = ssub.s32 %s15, 1
      %s21 = ssub.s32 %s15, 2
      %s22 = sadd.s32 %s15, 1
      %s23 = ssub.s32 %s15, %s22
      %p24 = scmp.eq.s32.totalorder %s23, 0
      %s26 = sadd.s32 %s25, 1
      %s27 = scalar_select %p24, %s25, %s26
      %p30 = pneg %p24
      %p31 = scmp.eq.s32.totalorder %s15, 5
      %p32 = por %p30, %p31
      %p33 = scmp.ne.s32.totalorder %s25, %s28
      %p34 = scmp.eq.s32.totalorder %s15, 0
      %p35 = por %p33, %p34
      %p36 = scmp.ne.s32.totalorder %s25, %s28
      %p37 = scmp.eq.s32.totalorder %s20, 5
      %p38 = por %p36, %p37
      %p39 = scmp.ne.s32.totalorder %s28, %s29
      %p40 = scmp.eq.s32.totalorder %s20, 0
      %p41 = por %p39, %p40
      %p42 = scmp.ne.s32.totalorder %s28, %s29
      %p43 = scmp.eq.s32.totalorder %s21, 5
      %p44 = por %p42, %p43
      %p46 = scmp.ne.s32.totalorder %s29, %s45
      %p47 = scmp.eq.s32.totalorder %s21, 0
      %p48 = por %p46, %p47
      %s49 = ssub.s32 %s15, %s22
      %p50 = scmp.eq.s32.totalorder %s49, 0
      %s52 = sadd.s32 %s51, 1
      %s53 = scalar_select %p50, %s51, %s52
      %p56 = pneg %p50
      %p57 = scmp.eq.s32.totalorder %s15, 5
      %p58 = por %p56, %p57
      %p59 = scmp.ne.s32.totalorder %s51, %s54
      %p60 = scmp.eq.s32.totalorder %s15, 0
      %p61 = por %p59, %p60
      %p62 = scmp.ne.s32.totalorder %s51, %s54
      %p63 = scmp.eq.s32.totalorder %s20, 5
      %p64 = por %p62, %p63
      %p65 = scmp.ne.s32.totalorder %s54, %s55
      %p66 = scmp.eq.s32.totalorder %s20, 0
      %p67 = por %p65, %p66
      %p68 = scmp.ne.s32.totalorder %s54, %s55
      %p69 = scmp.eq.s32.totalorder %s21, 5
      %p70 = por %p68, %p69
      %p72 = scmp.ne.s32.totalorder %s55, %s71
      %p73 = scmp.eq.s32.totalorder %s21, 0
      %p74 = por %p72, %p73
      %s76 = sadd.s32 %s75, 1
      %p79 = scmp.eq.s32.totalorder %s15, 5
      %p80 = scmp.ne.s32.totalorder %s75, %s77
      %p81 = scmp.eq.s32.totalorder %s15, 0
      %p82 = por %p80, %p81
      %p83 = scmp.ne.s32.totalorder %s75, %s77
      %p84 = scmp.eq.s32.totalorder %s20, 5
      %p85 = por %p83, %p84
      %p86 = scmp.ne.s32.totalorder %s77, %s78
      %p87 = scmp.eq.s32.totalorder %s20, 0
      %p88 = por %p86, %p87
      %p89 = scmp.ne.s32.totalorder %s77, %s78
      %p90 = scmp.eq.s32.totalorder %s21, 5
      %p91 = por %p89, %p90
      %p93 = scmp.ne.s32.totalorder %s78, %s92
      %p94 = scmp.eq.s32.totalorder %s21, 0
      %p95 = por %p93, %p94
      %s97 = sadd.s32 %s96, 1
      %p100 = scmp.eq.s32.totalorder %s15, 5
      %p101 = scmp.ne.s32.totalorder %s96, %s98
      %p102 = scmp.eq.s32.totalorder %s15, 0
      %p103 = por %p101, %p102
      %p104 = scmp.ne.s32.totalorder %s96, %s98
      %p105 = scmp.eq.s32.totalorder %s20, 5
      %p106 = por %p104, %p105
      %p107 = scmp.ne.s32.totalorder %s98, %s99
      %p108 = scmp.eq.s32.totalorder %s20, 0
      %p109 = por %p107, %p108
      %p110 = scmp.ne.s32.totalorder %s98, %s99
      %p111 = scmp.eq.s32.totalorder %s21, 5
      %p112 = por %p110, %p111
      %p114 = scmp.ne.s32.totalorder %s99, %s113
      %p115 = scmp.eq.s32.totalorder %s21, 0
      %p116 = por %p114, %p115
      %s117 = ssub.s32 %s15, %s22
      %p118 = scmp.eq.s32.totalorder %s117, 0
      %s120 = sadd.s32 %s119, 1
      %s121 = scalar_select %p118, %s119, %s120
      %p124 = pneg %p118
      %p125 = scmp.eq.s32.totalorder %s15, 5
      %p126 = por %p124, %p125
      %p127 = scmp.ne.s32.totalorder %s119, %s122
      %p128 = scmp.eq.s32.totalorder %s15, 0
      %p129 = por %p127, %p128
      %p130 = scmp.ne.s32.totalorder %s119, %s122
      %p131 = scmp.eq.s32.totalorder %s20, 5
      %p132 = por %p130, %p131
      %p133 = scmp.ne.s32.totalorder %s122, %s123
      %p134 = scmp.eq.s32.totalorder %s20, 0
      %p135 = por %p133, %p134
      %p136 = scmp.ne.s32.totalorder %s122, %s123
      %p137 = scmp.eq.s32.totalorder %s21, 5
      %p138 = por %p136, %p137
      %p140 = scmp.ne.s32.totalorder %s123, %s139
      %p141 = scmp.eq.s32.totalorder %s21, 0
      %p142 = por %p140, %p141
      %p143 = scmp.le.s32.totalorder 1, %s15
      %p144 = scmp.lt.s32.totalorder %s15, 7
      %p145 = pnand %p143, %p144
      %p146 = pneg %p145
      // Predicated region
      $region9: #{tpu_custom_call.1} parent=5 // pred_check
        _
      $region10: #{tpu_custom_call.1} parent=5 // pred_check_branch
        %148 = sbr.rel (%p145) target = $region12
      $region11: #{tpu_custom_call.1} parent=5 // pred_region
        %s149 = ssub.s32 %s15, 1
        // Predicated region
        $region13: #{tpu_custom_call.1} parent=11 // pred_check
          %p150 = pneg %p88
        $region14: #{tpu_custom_call.1} parent=11 // pred_check_branch
          %152 = sbr.rel (%p150) target = $region16
        $region15: #{tpu_custom_call.1} parent=11 // pred_region
          _
        $region16: #{tpu_custom_call.1} parent=11 // pred_fallthru
          _
        // Predicated region
        $region17: #{tpu_custom_call.1} parent=11 // pred_check
          %p153 = pneg %p109
        $region18: #{tpu_custom_call.1} parent=11 // pred_check_branch
          %155 = sbr.rel (%p153) target = $region20
        $region19: #{tpu_custom_call.1} parent=11 // pred_region
          _
        $region20: #{tpu_custom_call.1} parent=11 // pred_fallthru
          _
      $region12: #{tpu_custom_call.1} parent=5 // pred_fallthru
        _
      %p156 = scmp.lt.s32.totalorder %s15, 6
      // Predicated region
      $region21: #{tpu_custom_call.1} parent=5 // pred_check
        %p157 = pneg %p156
      $region22: #{tpu_custom_call.1} parent=5 // pred_check_branch
        %159 = sbr.rel (%p157) target = $region24
      $region23: #{tpu_custom_call.1} parent=5 // pred_region
        // Predicated region
        $region25: #{tpu_custom_call.1} parent=23 // pred_check
          %p160 = pneg %p35
        $region26: #{tpu_custom_call.1} parent=23 // pred_check_branch
          %162 = sbr.rel (%p160) target = $region28
        $region27: #{tpu_custom_call.1} parent=23 // pred_region
          %p163 = scmp.lt.s32.totalorder %s15, 5
          %s164 = scalar_select %p163, %s15, 5
          %s165 = smul.addr %s164, 32
          %s166 = smul.addr %s165, 8
          %s167 = scalar_lea.vmem %s1, %s166
        $region28: #{tpu_custom_call.1} parent=23 // pred_fallthru
          _
        // Predicated region
        $region29: #{tpu_custom_call.1} parent=23 // pred_check
          %p168 = pneg %p61
        $region30: #{tpu_custom_call.1} parent=23 // pred_check_branch
          %170 = sbr.rel (%p168) target = $region32
        $region31: #{tpu_custom_call.1} parent=23 // pred_region
          %p171 = scmp.lt.s32.totalorder %s15, 5
          %s172 = scalar_select %p171, %s15, 5
          %s173 = smul.addr %s172, 64
          %s174 = smul.addr %s173, 8
          %s175 = scalar_lea.vmem %s2, %s174
        $region32: #{tpu_custom_call.1} parent=23 // pred_fallthru
          _
      $region24: #{tpu_custom_call.1} parent=5 // pred_fallthru
        _
      %p176 = scmp.le.s32.totalorder 1, %s15
      %p177 = scmp.lt.s32.totalorder %s15, 7
      %p178 = pnand %p176, %p177
      %p179 = pneg %p178
      // Predicated region
      $region33: #{tpu_custom_call.1} parent=5 // pred_check
        _
      $region34: #{tpu_custom_call.1} parent=5 // pred_check_branch
        %181 = sbr.rel (%p178) target = $region36
      $region35: #{tpu_custom_call.1} parent=5 // pred_region
        %s182 = ssub.s32 %s15, 1
        %p183 = scmp.lt.s32.totalorder %s20, 5
        %s184 = scalar_select %p183, %s20, 5
        %s185 = smul.addr %s184, 32
        %s186 = smul.addr %s185, 8
        %s187 = scalar_lea.vmem %s1, %s186
        %p188 = pneg %p41
        %p189 = pneg %p38
        %p190 = scmp.lt.s32.totalorder %s20, 5
        %s191 = scalar_select %p190, %s20, 5
        %s192 = smul.addr %s191, 64
        %s193 = smul.addr %s192, 8
        %s194 = scalar_lea.vmem %s2, %s193
        %p195 = pneg %p67
        %p196 = pneg %p64
        %p197 = pneg %p88
        %p198 = pneg %p85
        %p199 = pneg %p109
        %p200 = pneg %p106
        %p201 = pneg %p135
        %p202 = pneg %p132
        %s203 = sand.u32 %s122, 1
        %s204 = scalar_lea.sflag [#allocation6], %s203
        %s205 = sand.u32 %s122, 1
        %s206 = smul.addr %s205, 8
        %s207 = scalar_lea.vmem [#allocation5], %s206
        %p208 = scmp.lt.s32.totalorder %s20, 5
        %s209 = scalar_select %p208, %s20, 5
        %s210 = smul.addr %s209, 32
        %s211 = smul.addr %s210, 8
        %s212 = scalar_lea.vmem %s1, %s211
        %p213 = scmp.lt.s32.totalorder %s20, 5
        %s214 = scalar_select %p213, %s20, 5
        %s215 = smul.addr %s214, 64
        %s216 = smul.addr %s215, 8
        %s217 = scalar_lea.vmem %s2, %s216
        %v218 = vld [vmem:[%s212] sm:$0xff]
        %v219 = vld [vmem:[%s212 + $0x8] sm:$0xff]
        %v220 = vld [vmem:[%s212 + $0x10] sm:$0xff]
        %v221 = vld [vmem:[%s212 + $0x18] sm:$0xff]
        %v222 = vld [vmem:[%s212 + $0x20] sm:$0xff]
        %v223 = vld [vmem:[%s212 + $0x28] sm:$0xff]
        %v224 = vld [vmem:[%s212 + $0x30] sm:$0xff]
        %v225 = vld [vmem:[%s212 + $0x38] sm:$0xff]
        %v226 = vld [vmem:[%s212 + $0x40] sm:$0xff]
        %v227 = vld [vmem:[%s212 + $0x48] sm:$0xff]
        %v228 = vld [vmem:[%s212 + $0x50] sm:$0xff]
        %v229 = vld [vmem:[%s212 + $0x58] sm:$0xff]
        %v230 = vld [vmem:[%s212 + $0x60] sm:$0xff]
        %v231 = vld [vmem:[%s212 + $0x68] sm:$0xff]
        %v232 = vld [vmem:[%s212 + $0x70] sm:$0xff]
        %v233 = vld [vmem:[%s212 + $0x78] sm:$0xff]
        %v234 = vld [vmem:[%s212 + $0x80] sm:$0xff]
        %v235 = vld [vmem:[%s212 + $0x88] sm:$0xff]
        %v236 = vld [vmem:[%s212 + $0x90] sm:$0xff]
        %v237 = vld [vmem:[%s212 + $0x98] sm:$0xff]
        %v238 = vld [vmem:[%s212 + $0xa0] sm:$0xff]
        %v239 = vld [vmem:[%s212 + $0xa8] sm:$0xff]
        %v240 = vld [vmem:[%s212 + $0xb0] sm:$0xff]
        %v241 = vld [vmem:[%s212 + $0xb8] sm:$0xff]
        %v242 = vld [vmem:[%s212 + $0xc0] sm:$0xff]
        %v243 = vld [vmem:[%s212 + $0xc8] sm:$0xff]
        %v244 = vld [vmem:[%s212 + $0xd0] sm:$0xff]
        %v245 = vld [vmem:[%s212 + $0xd8] sm:$0xff]
        %v246 = vld [vmem:[%s212 + $0xe0] sm:$0xff]
        %v247 = vld [vmem:[%s212 + $0xe8] sm:$0xff]
        %v248 = vld [vmem:[%s212 + $0xf0] sm:$0xff]
        %v249 = vld [vmem:[%s212 + $0xf8] sm:$0xff]
        %v250 = vld [vmem:[%s217] sm:$0xff]
        %v251 = vld [vmem:[%s217 + $0x8] sm:$0xff]
        %v252 = vld [vmem:[%s217 + $0x10] sm:$0xff]
        %v253 = vld [vmem:[%s217 + $0x18] sm:$0xff]
        %v254 = vld [vmem:[%s217 + $0x20] sm:$0xff]
        %v255 = vld [vmem:[%s217 + $0x28] sm:$0xff]
        %v256 = vld [vmem:[%s217 + $0x30] sm:$0xff]
        %v257 = vld [vmem:[%s217 + $0x38] sm:$0xff]
        %v258 = vld [vmem:[%s217 + $0x40] sm:$0xff]
        %v259 = vld [vmem:[%s217 + $0x48] sm:$0xff]
        %v260 = vld [vmem:[%s217 + $0x50] sm:$0xff]
        %v261 = vld [vmem:[%s217 + $0x58] sm:$0xff]
        %v262 = vld [vmem:[%s217 + $0x60] sm:$0xff]
        %v263 = vld [vmem:[%s217 + $0x68] sm:$0xff]
        %v264 = vld [vmem:[%s217 + $0x70] sm:$0xff]
        %v265 = vld [vmem:[%s217 + $0x78] sm:$0xff]
        %v266 = vld [vmem:[%s217 + $0x80] sm:$0xff]
        %v267 = vld [vmem:[%s217 + $0x88] sm:$0xff]
        %v268 = vld [vmem:[%s217 + $0x90] sm:$0xff]
        %v269 = vld [vmem:[%s217 + $0x98] sm:$0xff]
        %v270 = vld [vmem:[%s217 + $0xa0] sm:$0xff]
        %v271 = vld [vmem:[%s217 + $0xa8] sm:$0xff]
        %v272 = vld [vmem:[%s217 + $0xb0] sm:$0xff]
        %v273 = vld [vmem:[%s217 + $0xb8] sm:$0xff]
        %v274 = vld [vmem:[%s217 + $0xc0] sm:$0xff]
        %v275 = vld [vmem:[%s217 + $0xc8] sm:$0xff]
        %v276 = vld [vmem:[%s217 + $0xd0] sm:$0xff]
        %v277 = vld [vmem:[%s217 + $0xd8] sm:$0xff]
        %v278 = vld [vmem:[%s217 + $0xe0] sm:$0xff]
        %v279 = vld [vmem:[%s217 + $0xe8] sm:$0xff]
        %v280 = vld [vmem:[%s217 + $0xf0] sm:$0xff]
        %v281 = vld [vmem:[%s217 + $0xf8] sm:$0xff]
        %v282 = vld [vmem:[%s217 + $0x100] sm:$0xff]
        %v283 = vld [vmem:[%s217 + $0x108] sm:$0xff]
        %v284 = vld [vmem:[%s217 + $0x110] sm:$0xff]
        %v285 = vld [vmem:[%s217 + $0x118] sm:$0xff]
        %v286 = vld [vmem:[%s217 + $0x120] sm:$0xff]
        %v287 = vld [vmem:[%s217 + $0x128] sm:$0xff]
        %v288 = vld [vmem:[%s217 + $0x130] sm:$0xff]
        %v289 = vld [vmem:[%s217 + $0x138] sm:$0xff]
        %v290 = vld [vmem:[%s217 + $0x140] sm:$0xff]
        %v291 = vld [vmem:[%s217 + $0x148] sm:$0xff]
        %v292 = vld [vmem:[%s217 + $0x150] sm:$0xff]
        %v293 = vld [vmem:[%s217 + $0x158] sm:$0xff]
        %v294 = vld [vmem:[%s217 + $0x160] sm:$0xff]
        %v295 = vld [vmem:[%s217 + $0x168] sm:$0xff]
        %v296 = vld [vmem:[%s217 + $0x170] sm:$0xff]
        %v297 = vld [vmem:[%s217 + $0x178] sm:$0xff]
        %v298 = vld [vmem:[%s217 + $0x180] sm:$0xff]
        %v299 = vld [vmem:[%s217 + $0x188] sm:$0xff]
        %v300 = vld [vmem:[%s217 + $0x190] sm:$0xff]
        %v301 = vld [vmem:[%s217 + $0x198] sm:$0xff]
        %v302 = vld [vmem:[%s217 + $0x1a0] sm:$0xff]
        %v303 = vld [vmem:[%s217 + $0x1a8] sm:$0xff]
        %v304 = vld [vmem:[%s217 + $0x1b0] sm:$0xff]
        %v305 = vld [vmem:[%s217 + $0x1b8] sm:$0xff]
        %v306 = vld [vmem:[%s217 + $0x1c0] sm:$0xff]
        %v307 = vld [vmem:[%s217 + $0x1c8] sm:$0xff]
        %v308 = vld [vmem:[%s217 + $0x1d0] sm:$0xff]
        %v309 = vld [vmem:[%s217 + $0x1d8] sm:$0xff]
        %v310 = vld [vmem:[%s217 + $0x1e0] sm:$0xff]
        %v311 = vld [vmem:[%s217 + $0x1e8] sm:$0xff]
        %v312 = vld [vmem:[%s217 + $0x1f0] sm:$0xff]
        %v313 = vld [vmem:[%s217 + $0x1f8] sm:$0xff]
        %vm314 = vcmask 203776
        %v315 = vsel %vm314, %v218, 0.0
        %316 = vadd.xlane.f32.xlu0 %v315
        %v317 = vpop.xlane.xlu0 %316
        %v318 = vsel %vm314, %v219, 0.0
        %319 = vadd.xlane.f32.xlu0 %v318
        %v320 = vpop.xlane.xlu0 %319
        %v321 = vsel %vm314, %v220, 0.0
        %322 = vadd.xlane.f32.xlu0 %v321
        %v323 = vpop.xlane.xlu0 %322
        %v324 = vsel %vm314, %v221, 0.0
        %325 = vadd.xlane.f32.xlu0 %v324
        %v326 = vpop.xlane.xlu0 %325
        %v327 = vsel %vm314, %v222, 0.0
        %328 = vadd.xlane.f32.xlu0 %v327
        %v329 = vpop.xlane.xlu0 %328
        %v330 = vsel %vm314, %v223, 0.0
        %331 = vadd.xlane.f32.xlu0 %v330
        %v332 = vpop.xlane.xlu0 %331
        %v333 = vsel %vm314, %v224, 0.0
        %334 = vadd.xlane.f32.xlu0 %v333
        %v335 = vpop.xlane.xlu0 %334
        %v336 = vsel %vm314, %v225, 0.0
        %337 = vadd.xlane.f32.xlu0 %v336
        %v338 = vpop.xlane.xlu0 %337
        %v339 = vsel %vm314, %v226, 0.0
        %340 = vadd.xlane.f32.xlu0 %v339
        %v341 = vpop.xlane.xlu0 %340
        %v342 = vsel %vm314, %v227, 0.0
        %343 = vadd.xlane.f32.xlu0 %v342
        %v344 = vpop.xlane.xlu0 %343
        %v345 = vsel %vm314, %v228, 0.0
        %346 = vadd.xlane.f32.xlu0 %v345
        %v347 = vpop.xlane.xlu0 %346
        %v348 = vsel %vm314, %v229, 0.0
        %349 = vadd.xlane.f32.xlu0 %v348
        %v350 = vpop.xlane.xlu0 %349
        %v351 = vsel %vm314, %v230, 0.0
        %352 = vadd.xlane.f32.xlu0 %v351
        %v353 = vpop.xlane.xlu0 %352
        %v354 = vsel %vm314, %v231, 0.0
        %355 = vadd.xlane.f32.xlu0 %v354
        %v356 = vpop.xlane.xlu0 %355
        %v357 = vsel %vm314, %v232, 0.0
        %358 = vadd.xlane.f32.xlu0 %v357
        %v359 = vpop.xlane.xlu0 %358
        %v360 = vsel %vm314, %v233, 0.0
        %361 = vadd.xlane.f32.xlu0 %v360
        %v362 = vpop.xlane.xlu0 %361
        %v363 = vsel %vm314, %v234, 0.0
        %364 = vadd.xlane.f32.xlu0 %v363
        %v365 = vpop.xlane.xlu0 %364
        %v366 = vsel %vm314, %v235, 0.0
        %367 = vadd.xlane.f32.xlu0 %v366
        %v368 = vpop.xlane.xlu0 %367
        %v369 = vsel %vm314, %v236, 0.0
        %370 = vadd.xlane.f32.xlu0 %v369
        %v371 = vpop.xlane.xlu0 %370
        %v372 = vsel %vm314, %v237, 0.0
        %373 = vadd.xlane.f32.xlu0 %v372
        %v374 = vpop.xlane.xlu0 %373
        %v375 = vsel %vm314, %v238, 0.0
        %376 = vadd.xlane.f32.xlu0 %v375
        %v377 = vpop.xlane.xlu0 %376
        %v378 = vsel %vm314, %v239, 0.0
        %379 = vadd.xlane.f32.xlu0 %v378
        %v380 = vpop.xlane.xlu0 %379
        %v381 = vsel %vm314, %v240, 0.0
        %382 = vadd.xlane.f32.xlu0 %v381
        %v383 = vpop.xlane.xlu0 %382
        %v384 = vsel %vm314, %v241, 0.0
        %385 = vadd.xlane.f32.xlu0 %v384
        %v386 = vpop.xlane.xlu0 %385
        %v387 = vsel %vm314, %v242, 0.0
        %388 = vadd.xlane.f32.xlu0 %v387
        %v389 = vpop.xlane.xlu0 %388
        %v390 = vsel %vm314, %v243, 0.0
        %391 = vadd.xlane.f32.xlu0 %v390
        %v392 = vpop.xlane.xlu0 %391
        %v393 = vsel %vm314, %v244, 0.0
        %394 = vadd.xlane.f32.xlu0 %v393
        %v395 = vpop.xlane.xlu0 %394
        %v396 = vsel %vm314, %v245, 0.0
        %397 = vadd.xlane.f32.xlu0 %v396
        %v398 = vpop.xlane.xlu0 %397
        %v399 = vsel %vm314, %v246, 0.0
        %400 = vadd.xlane.f32.xlu0 %v399
        %v401 = vpop.xlane.xlu0 %400
        %v402 = vsel %vm314, %v247, 0.0
        %403 = vadd.xlane.f32.xlu0 %v402
        %v404 = vpop.xlane.xlu0 %403
        %v405 = vsel %vm314, %v248, 0.0
        %406 = vadd.xlane.f32.xlu0 %v405
        %v407 = vpop.xlane.xlu0 %406
        %v408 = vsel %vm314, %v249, 0.0
        %409 = vadd.xlane.f32.xlu0 %v408
        %v410 = vpop.xlane.xlu0 %409
        %v411 = vrcp.pop 25.0
        %v412 = vmul.f32 %v317, %v411
        %v413 = vmul.f32 %v320, %v411
        %v414 = vmul.f32 %v323, %v411
        %v415 = vmul.f32 %v326, %v411
        %v416 = vmul.f32 %v329, %v411
        %v417 = vmul.f32 %v332, %v411
        %v418 = vmul.f32 %v335, %v411
        %v419 = vmul.f32 %v338, %v411
        %v420 = vmul.f32 %v341, %v411
        %v421 = vmul.f32 %v344, %v411
        %v422 = vmul.f32 %v347, %v411
        %v423 = vmul.f32 %v350, %v411
        %v424 = vmul.f32 %v353, %v411
        %v425 = vmul.f32 %v356, %v411
        %v426 = vmul.f32 %v359, %v411
        %v427 = vmul.f32 %v362, %v411
        %v428 = vmul.f32 %v365, %v411
        %v429 = vmul.f32 %v368, %v411
        %v430 = vmul.f32 %v371, %v411
        %v431 = vmul.f32 %v374, %v411
        %v432 = vmul.f32 %v377, %v411
        %v433 = vmul.f32 %v380, %v411
        %v434 = vmul.f32 %v383, %v411
        %v435 = vmul.f32 %v386, %v411
        %v436 = vmul.f32 %v389, %v411
        %v437 = vmul.f32 %v392, %v411
        %v438 = vmul.f32 %v395, %v411
        %v439 = vmul.f32 %v398, %v411
        %v440 = vmul.f32 %v401, %v411
        %v441 = vmul.f32 %v404, %v411
        %v442 = vmul.f32 %v407, %v411
        %v443 = vmul.f32 %v410, %v411
        %v444 = vsel %vm314, %v250, 0.0
        %445 = vadd.xlane.f32.xlu0 %v444
        %v446 = vpop.xlane.xlu0 %445
        %v447 = vsel %vm314, %v251, 0.0
        %448 = vadd.xlane.f32.xlu0 %v447
        %v449 = vpop.xlane.xlu0 %448
        %v450 = vsel %vm314, %v252, 0.0
        %451 = vadd.xlane.f32.xlu0 %v450
        %v452 = vpop.xlane.xlu0 %451
        %v453 = vsel %vm314, %v253, 0.0
        %454 = vadd.xlane.f32.xlu0 %v453
        %v455 = vpop.xlane.xlu0 %454
        %v456 = vsel %vm314, %v254, 0.0
        %457 = vadd.xlane.f32.xlu0 %v456
        %v458 = vpop.xlane.xlu0 %457
        %v459 = vsel %vm314, %v255, 0.0
        %460 = vadd.xlane.f32.xlu0 %v459
        %v461 = vpop.xlane.xlu0 %460
        %v462 = vsel %vm314, %v256, 0.0
        %463 = vadd.xlane.f32.xlu0 %v462
        %v464 = vpop.xlane.xlu0 %463
        %v465 = vsel %vm314, %v257, 0.0
        %466 = vadd.xlane.f32.xlu0 %v465
        %v467 = vpop.xlane.xlu0 %466
        %v468 = vsel %vm314, %v258, 0.0
        %469 = vadd.xlane.f32.xlu0 %v468
        %v470 = vpop.xlane.xlu0 %469
        %v471 = vsel %vm314, %v259, 0.0
        %472 = vadd.xlane.f32.xlu0 %v471
        %v473 = vpop.xlane.xlu0 %472
        %v474 = vsel %vm314, %v260, 0.0
        %475 = vadd.xlane.f32.xlu0 %v474
        %v476 = vpop.xlane.xlu0 %475
        %v477 = vsel %vm314, %v261, 0.0
        %478 = vadd.xlane.f32.xlu0 %v477
        %v479 = vpop.xlane.xlu0 %478
        %v480 = vsel %vm314, %v262, 0.0
        %481 = vadd.xlane.f32.xlu0 %v480
        %v482 = vpop.xlane.xlu0 %481
        %v483 = vsel %vm314, %v263, 0.0
        %484 = vadd.xlane.f32.xlu0 %v483
        %v485 = vpop.xlane.xlu0 %484
        %v486 = vsel %vm314, %v264, 0.0
        %487 = vadd.xlane.f32.xlu0 %v486
        %v488 = vpop.xlane.xlu0 %487
        %v489 = vsel %vm314, %v265, 0.0
        %490 = vadd.xlane.f32.xlu0 %v489
        %v491 = vpop.xlane.xlu0 %490
        %v492 = vsel %vm314, %v266, 0.0
        %493 = vadd.xlane.f32.xlu0 %v492
        %v494 = vpop.xlane.xlu0 %493
        %v495 = vsel %vm314, %v267, 0.0
        %496 = vadd.xlane.f32.xlu0 %v495
        %v497 = vpop.xlane.xlu0 %496
        %v498 = vsel %vm314, %v268, 0.0
        %499 = vadd.xlane.f32.xlu0 %v498
        %v500 = vpop.xlane.xlu0 %499
        %v501 = vsel %vm314, %v269, 0.0
        %502 = vadd.xlane.f32.xlu0 %v501
        %v503 = vpop.xlane.xlu0 %502
        %v504 = vsel %vm314, %v270, 0.0
        %505 = vadd.xlane.f32.xlu0 %v504
        %v506 = vpop.xlane.xlu0 %505
        %v507 = vsel %vm314, %v271, 0.0
        %508 = vadd.xlane.f32.xlu0 %v507
        %v509 = vpop.xlane.xlu0 %508
        %v510 = vsel %vm314, %v272, 0.0
        %511 = vadd.xlane.f32.xlu0 %v510
        %v512 = vpop.xlane.xlu0 %511
        %v513 = vsel %vm314, %v273, 0.0
        %514 = vadd.xlane.f32.xlu0 %v513
        %v515 = vpop.xlane.xlu0 %514
        %v516 = vsel %vm314, %v274, 0.0
        %517 = vadd.xlane.f32.xlu0 %v516
        %v518 = vpop.xlane.xlu0 %517
        %v519 = vsel %vm314, %v275, 0.0
        %520 = vadd.xlane.f32.xlu0 %v519
        %v521 = vpop.xlane.xlu0 %520
        %v522 = vsel %vm314, %v276, 0.0
        %523 = vadd.xlane.f32.xlu0 %v522
        %v524 = vpop.xlane.xlu0 %523
        %v525 = vsel %vm314, %v277, 0.0
        %526 = vadd.xlane.f32.xlu0 %v525
        %v527 = vpop.xlane.xlu0 %526
        %v528 = vsel %vm314, %v278, 0.0
        %529 = vadd.xlane.f32.xlu0 %v528
        %v530 = vpop.xlane.xlu0 %529
        %v531 = vsel %vm314, %v279, 0.0
        %532 = vadd.xlane.f32.xlu0 %v531
        %v533 = vpop.xlane.xlu0 %532
        %v534 = vsel %vm314, %v280, 0.0
        %535 = vadd.xlane.f32.xlu0 %v534
        %v536 = vpop.xlane.xlu0 %535
        %v537 = vsel %vm314, %v281, 0.0
        %538 = vadd.xlane.f32.xlu0 %v537
        %v539 = vpop.xlane.xlu0 %538
        %v540 = vsel %vm314, %v282, 0.0
        %541 = vadd.xlane.f32.xlu0 %v540
        %v542 = vpop.xlane.xlu0 %541
        %v543 = vsel %vm314, %v283, 0.0
        %544 = vadd.xlane.f32.xlu0 %v543
        %v545 = vpop.xlane.xlu0 %544
        %v546 = vsel %vm314, %v284, 0.0
        %547 = vadd.xlane.f32.xlu0 %v546
        %v548 = vpop.xlane.xlu0 %547
        %v549 = vsel %vm314, %v285, 0.0
        %550 = vadd.xlane.f32.xlu0 %v549
        %v551 = vpop.xlane.xlu0 %550
        %v552 = vsel %vm314, %v286, 0.0
        %553 = vadd.xlane.f32.xlu0 %v552
        %v554 = vpop.xlane.xlu0 %553
        %v555 = vsel %vm314, %v287, 0.0
        %556 = vadd.xlane.f32.xlu0 %v555
        %v557 = vpop.xlane.xlu0 %556
        %v558 = vsel %vm314, %v288, 0.0
        %559 = vadd.xlane.f32.xlu0 %v558
        %v560 = vpop.xlane.xlu0 %559
        %v561 = vsel %vm314, %v289, 0.0
        %562 = vadd.xlane.f32.xlu0 %v561
        %v563 = vpop.xlane.xlu0 %562
        %v564 = vsel %vm314, %v290, 0.0
        %565 = vadd.xlane.f32.xlu0 %v564
        %v566 = vpop.xlane.xlu0 %565
        %v567 = vsel %vm314, %v291, 0.0
        %568 = vadd.xlane.f32.xlu0 %v567
        %v569 = vpop.xlane.xlu0 %568
        %v570 = vsel %vm314, %v292, 0.0
        %571 = vadd.xlane.f32.xlu0 %v570
        %v572 = vpop.xlane.xlu0 %571
        %v573 = vsel %vm314, %v293, 0.0
        %574 = vadd.xlane.f32.xlu0 %v573
        %v575 = vpop.xlane.xlu0 %574
        %v576 = vsel %vm314, %v294, 0.0
        %577 = vadd.xlane.f32.xlu0 %v576
        %v578 = vpop.xlane.xlu0 %577
        %v579 = vsel %vm314, %v295, 0.0
        %580 = vadd.xlane.f32.xlu0 %v579
        %v581 = vpop.xlane.xlu0 %580
        %v582 = vsel %vm314, %v296, 0.0
        %583 = vadd.xlane.f32.xlu0 %v582
        %v584 = vpop.xlane.xlu0 %583
        %v585 = vsel %vm314, %v297, 0.0
        %586 = vadd.xlane.f32.xlu0 %v585
        %v587 = vpop.xlane.xlu0 %586
        %v588 = vsel %vm314, %v298, 0.0
        %589 = vadd.xlane.f32.xlu0 %v588
        %v590 = vpop.xlane.xlu0 %589
        %v591 = vsel %vm314, %v299, 0.0
        %592 = vadd.xlane.f32.xlu0 %v591
        %v593 = vpop.xlane.xlu0 %592
        %v594 = vsel %vm314, %v300, 0.0
        %595 = vadd.xlane.f32.xlu0 %v594
        %v596 = vpop.xlane.xlu0 %595
        %v597 = vsel %vm314, %v301, 0.0
        %598 = vadd.xlane.f32.xlu0 %v597
        %v599 = vpop.xlane.xlu0 %598
        %v600 = vsel %vm314, %v302, 0.0
        %601 = vadd.xlane.f32.xlu0 %v600
        %v602 = vpop.xlane.xlu0 %601
        %v603 = vsel %vm314, %v303, 0.0
        %604 = vadd.xlane.f32.xlu0 %v603
        %v605 = vpop.xlane.xlu0 %604
        %v606 = vsel %vm314, %v304, 0.0
        %607 = vadd.xlane.f32.xlu0 %v606
        %v608 = vpop.xlane.xlu0 %607
        %v609 = vsel %vm314, %v305, 0.0
        %610 = vadd.xlane.f32.xlu0 %v609
        %v611 = vpop.xlane.xlu0 %610
        %v612 = vsel %vm314, %v306, 0.0
        %613 = vadd.xlane.f32.xlu0 %v612
        %v614 = vpop.xlane.xlu0 %613
        %v615 = vsel %vm314, %v307, 0.0
        %616 = vadd.xlane.f32.xlu0 %v615
        %v617 = vpop.xlane.xlu0 %616
        %v618 = vsel %vm314, %v308, 0.0
        %619 = vadd.xlane.f32.xlu0 %v618
        %v620 = vpop.xlane.xlu0 %619
        %v621 = vsel %vm314, %v309, 0.0
        %622 = vadd.xlane.f32.xlu0 %v621
        %v623 = vpop.xlane.xlu0 %622
        %v624 = vsel %vm314, %v310, 0.0
        %625 = vadd.xlane.f32.xlu0 %v624
        %v626 = vpop.xlane.xlu0 %625
        %v627 = vsel %vm314, %v311, 0.0
        %628 = vadd.xlane.f32.xlu0 %v627
        %v629 = vpop.xlane.xlu0 %628
        %v630 = vsel %vm314, %v312, 0.0
        %631 = vadd.xlane.f32.xlu0 %v630
        %v632 = vpop.xlane.xlu0 %631
        %v633 = vsel %vm314, %v313, 0.0
        %634 = vadd.xlane.f32.xlu0 %v633
        %v635 = vpop.xlane.xlu0 %634
        %v636 = vmul.f32 %v446, %v411
        %v637 = vmul.f32 %v449, %v411
        %v638 = vmul.f32 %v452, %v411
        %v639 = vmul.f32 %v455, %v411
        %v640 = vmul.f32 %v458, %v411
        %v641 = vmul.f32 %v461, %v411
        %v642 = vmul.f32 %v464, %v411
        %v643 = vmul.f32 %v467, %v411
        %v644 = vmul.f32 %v470, %v411
        %v645 = vmul.f32 %v473, %v411
        %v646 = vmul.f32 %v476, %v411
        %v647 = vmul.f32 %v479, %v411
        %v648 = vmul.f32 %v482, %v411
        %v649 = vmul.f32 %v485, %v411
        %v650 = vmul.f32 %v488, %v411
        %v651 = vmul.f32 %v491, %v411
        %v652 = vmul.f32 %v494, %v411
        %v653 = vmul.f32 %v497, %v411
        %v654 = vmul.f32 %v500, %v411
        %v655 = vmul.f32 %v503, %v411
        %v656 = vmul.f32 %v506, %v411
        %v657 = vmul.f32 %v509, %v411
        %v658 = vmul.f32 %v512, %v411
        %v659 = vmul.f32 %v515, %v411
        %v660 = vmul.f32 %v518, %v411
        %v661 = vmul.f32 %v521, %v411
        %v662 = vmul.f32 %v524, %v411
        %v663 = vmul.f32 %v527, %v411
        %v664 = vmul.f32 %v530, %v411
        %v665 = vmul.f32 %v533, %v411
        %v666 = vmul.f32 %v536, %v411
        %v667 = vmul.f32 %v539, %v411
        %v668 = vmul.f32 %v542, %v411
        %v669 = vmul.f32 %v545, %v411
        %v670 = vmul.f32 %v548, %v411
        %v671 = vmul.f32 %v551, %v411
        %v672 = vmul.f32 %v554, %v411
        %v673 = vmul.f32 %v557, %v411
        %v674 = vmul.f32 %v560, %v411
        %v675 = vmul.f32 %v563, %v411
        %v676 = vmul.f32 %v566, %v411
        %v677 = vmul.f32 %v569, %v411
        %v678 = vmul.f32 %v572, %v411
        %v679 = vmul.f32 %v575, %v411
        %v680 = vmul.f32 %v578, %v411
        %v681 = vmul.f32 %v581, %v411
        %v682 = vmul.f32 %v584, %v411
        %v683 = vmul.f32 %v587, %v411
        %v684 = vmul.f32 %v590, %v411
        %v685 = vmul.f32 %v593, %v411
        %v686 = vmul.f32 %v596, %v411
        %v687 = vmul.f32 %v599, %v411
        %v688 = vmul.f32 %v602, %v411
        %v689 = vmul.f32 %v605, %v411
        %v690 = vmul.f32 %v608, %v411
        %v691 = vmul.f32 %v611, %v411
        %v692 = vmul.f32 %v614, %v411
        %v693 = vmul.f32 %v617, %v411
        %v694 = vmul.f32 %v620, %v411
        %v695 = vmul.f32 %v623, %v411
        %v696 = vmul.f32 %v626, %v411
        %v697 = vmul.f32 %v629, %v411
        %v698 = vmul.f32 %v632, %v411
        %v699 = vmul.f32 %v635, %v411
        %v732 = vlaneseq
        %v733 = vand.u32 %v732, 127
        %v734 = vlaneseq
        %v735 = vshrl.u32 %v734, 7
        %v736 = vsub.s32 %v733, %v735
        %v737 = vrot.slane %v412, %v736
        %v738 = vadd.s32 %v733, 4294967288
        %v739 = vlaneseq
        %v740 = vshrl.u32 %v739, 7
        %v741 = vsub.s32 %v738, %v740
        %v742 = vrot.slane %v413, %v741
        %vm743 = vcmask 130112
        %v744 = vsel %vm743, %v742, %v737
        %v745 = vadd.s32 %v733, 4294967280
        %v746 = vlaneseq
        %v747 = vshrl.u32 %v746, 7
        %v748 = vsub.s32 %v745, %v747
        %v749 = vrot.slane %v414, %v748
        %vm750 = vcmask 195712
        %v751 = vsel %vm750, %v749, %v744
        %v752 = vadd.s32 %v733, 4294967272
        %v753 = vlaneseq
        %v754 = vshrl.u32 %v753, 7
        %v755 = vsub.s32 %v752, %v754
        %v756 = vrot.slane %v415, %v755
        %vm757 = vcmask 261312
        %v758 = vsel %vm757, %v756, %v751
        %v759 = vadd.s32 %v733, 4294967264
        %v760 = vlaneseq
        %v761 = vshrl.u32 %v760, 7
        %v762 = vsub.s32 %v759, %v761
        %v763 = vrot.slane %v416, %v762
        %vm764 = vcmask 326912
        %v765 = vsel %vm764, %v763, %v758
        %v766 = vadd.s32 %v733, 4294967256
        %v767 = vlaneseq
        %v768 = vshrl.u32 %v767, 7
        %v769 = vsub.s32 %v766, %v768
        %v770 = vrot.slane %v417, %v769
        %vm771 = vcmask 392512
        %v772 = vsel %vm771, %v770, %v765
        %v773 = vadd.s32 %v733, 4294967248
        %v774 = vlaneseq
        %v775 = vshrl.u32 %v774, 7
        %v776 = vsub.s32 %v773, %v775
        %v777 = vrot.slane %v418, %v776
        %vm778 = vcmask 458112
        %v779 = vsel %vm778, %v777, %v772
        %v780 = vadd.s32 %v733, 4294967240
        %v781 = vlaneseq
        %v782 = vshrl.u32 %v781, 7
        %v783 = vsub.s32 %v780, %v782
        %v784 = vrot.slane %v419, %v783
        %vm785 = vcmask 523712
        %v786 = vsel %vm785, %v784, %v779
        %v787 = vlaneseq
        %v788 = vshrl.u32 %v787, 7
        %v789 = vsub.s32 %v733, %v788
        %v790 = vrot.slane %v420, %v789
        %v791 = vlaneseq
        %v792 = vshrl.u32 %v791, 7
        %v793 = vsub.s32 %v738, %v792
        %v794 = vrot.slane %v421, %v793
        %v795 = vsel %vm743, %v794, %v790
        %v796 = vlaneseq
        %v797 = vshrl.u32 %v796, 7
        %v798 = vsub.s32 %v745, %v797
        %v799 = vrot.slane %v422, %v798
        %v800 = vsel %vm750, %v799, %v795
        %v801 = vlaneseq
        %v802 = vshrl.u32 %v801, 7
        %v803 = vsub.s32 %v752, %v802
        %v804 = vrot.slane %v423, %v803
        %v805 = vsel %vm757, %v804, %v800
        %v806 = vlaneseq
        %v807 = vshrl.u32 %v806, 7
        %v808 = vsub.s32 %v759, %v807
        %v809 = vrot.slane %v424, %v808
        %v810 = vsel %vm764, %v809, %v805
        %v811 = vlaneseq
        %v812 = vshrl.u32 %v811, 7
        %v813 = vsub.s32 %v766, %v812
        %v814 = vrot.slane %v425, %v813
        %v815 = vsel %vm771, %v814, %v810
        %v816 = vlaneseq
        %v817 = vshrl.u32 %v816, 7
        %v818 = vsub.s32 %v773, %v817
        %v819 = vrot.slane %v426, %v818
        %v820 = vsel %vm778, %v819, %v815
        %v821 = vlaneseq
        %v822 = vshrl.u32 %v821, 7
        %v823 = vsub.s32 %v780, %v822
        %v824 = vrot.slane %v427, %v823
        %v825 = vsel %vm785, %v824, %v820
        %v826 = vlaneseq
        %v827 = vshrl.u32 %v826, 7
        %v828 = vsub.s32 %v733, %v827
        %v829 = vrot.slane %v428, %v828
        %v830 = vlaneseq
        %v831 = vshrl.u32 %v830, 7
        %v832 = vsub.s32 %v738, %v831
        %v833 = vrot.slane %v429, %v832
        %v834 = vsel %vm743, %v833, %v829
        %v835 = vlaneseq
        %v836 = vshrl.u32 %v835, 7
        %v837 = vsub.s32 %v745, %v836
        %v838 = vrot.slane %v430, %v837
        %v839 = vsel %vm750, %v838, %v834
        %v840 = vlaneseq
        %v841 = vshrl.u32 %v840, 7
        %v842 = vsub.s32 %v752, %v841
        %v843 = vrot.slane %v431, %v842
        %v844 = vsel %vm757, %v843, %v839
        %v845 = vlaneseq
        %v846 = vshrl.u32 %v845, 7
        %v847 = vsub.s32 %v759, %v846
        %v848 = vrot.slane %v432, %v847
        %v849 = vsel %vm764, %v848, %v844
        %v850 = vlaneseq
        %v851 = vshrl.u32 %v850, 7
        %v852 = vsub.s32 %v766, %v851
        %v853 = vrot.slane %v433, %v852
        %v854 = vsel %vm771, %v853, %v849
        %v855 = vlaneseq
        %v856 = vshrl.u32 %v855, 7
        %v857 = vsub.s32 %v773, %v856
        %v858 = vrot.slane %v434, %v857
        %v859 = vsel %vm778, %v858, %v854
        %v860 = vlaneseq
        %v861 = vshrl.u32 %v860, 7
        %v862 = vsub.s32 %v780, %v861
        %v863 = vrot.slane %v435, %v862
        %v864 = vsel %vm785, %v863, %v859
        %v865 = vlaneseq
        %v866 = vshrl.u32 %v865, 7
        %v867 = vsub.s32 %v733, %v866
        %v868 = vrot.slane %v436, %v867
        %v869 = vlaneseq
        %v870 = vshrl.u32 %v869, 7
        %v871 = vsub.s32 %v738, %v870
        %v872 = vrot.slane %v437, %v871
        %v873 = vsel %vm743, %v872, %v868
        %v874 = vlaneseq
        %v875 = vshrl.u32 %v874, 7
        %v876 = vsub.s32 %v745, %v875
        %v877 = vrot.slane %v438, %v876
        %v878 = vsel %vm750, %v877, %v873
        %v879 = vlaneseq
        %v880 = vshrl.u32 %v879, 7
        %v881 = vsub.s32 %v752, %v880
        %v882 = vrot.slane %v439, %v881
        %v883 = vsel %vm757, %v882, %v878
        %v884 = vlaneseq
        %v885 = vshrl.u32 %v884, 7
        %v886 = vsub.s32 %v759, %v885
        %v887 = vrot.slane %v440, %v886
        %v888 = vsel %vm764, %v887, %v883
        %v889 = vlaneseq
        %v890 = vshrl.u32 %v889, 7
        %v891 = vsub.s32 %v766, %v890
        %v892 = vrot.slane %v441, %v891
        %v893 = vsel %vm771, %v892, %v888
        %v894 = vlaneseq
        %v895 = vshrl.u32 %v894, 7
        %v896 = vsub.s32 %v773, %v895
        %v897 = vrot.slane %v442, %v896
        %v898 = vsel %vm778, %v897, %v893
        %v899 = vlaneseq
        %v900 = vshrl.u32 %v899, 7
        %v901 = vsub.s32 %v780, %v900
        %v902 = vrot.slane %v443, %v901
        %v903 = vsel %vm785, %v902, %v898
        %vm904 = vcmask 1041409
        %v905 = vsel %vm904, %v825, %v786
        %vm906 = vcmask 1042434
        %v907 = vsel %vm906, %v864, %v905
        %vm908 = vcmask 1043459
        %v909 = vsel %vm908, %v903, %v907
        %vm911 = vcmask 519168
        %v912 = vsel %vm911, %v909, 0.0
        %913 = vadd.xlane.f32.xlu0 %v912
        %v914 = vpop.xlane.xlu0 %913
        %v915 = vrcp.pop 64.0
        %v916 = vmul.f32 %v914, %v915
        %v918 = vlaneseq
        %v919 = vshrl.u32 %v918, 7
        %v920 = vsub.s32 0, %v919
        %v921 = vrot.slane %v916, %v920
        %v922 = vlaneseq
        %v923 = vshrl.u32 %v922, 7
        %v924 = vsub.s32 1, %v923
        %v925 = vrot.slane %v916, %v924
        %v926 = vlaneseq
        %v927 = vshrl.u32 %v926, 7
        %v928 = vsub.s32 2, %v927
        %v929 = vrot.slane %v916, %v928
        %v930 = vlaneseq
        %v931 = vshrl.u32 %v930, 7
        %v932 = vsub.s32 3, %v931
        %v933 = vrot.slane %v916, %v932
        %v938 = vsub.f32 %v412, %v921
        %v939 = vsub.f32 %v413, %v921
        %v940 = vsub.f32 %v414, %v921
        %v941 = vsub.f32 %v415, %v921
        %v942 = vsub.f32 %v416, %v921
        %v943 = vsub.f32 %v417, %v921
        %v944 = vsub.f32 %v418, %v921
        %v945 = vsub.f32 %v419, %v921
        %v946 = vsub.f32 %v420, %v925
        %v947 = vsub.f32 %v421, %v925
        %v948 = vsub.f32 %v422, %v925
        %v949 = vsub.f32 %v423, %v925
        %v950 = vsub.f32 %v424, %v925
        %v951 = vsub.f32 %v425, %v925
        %v952 = vsub.f32 %v426, %v925
        %v953 = vsub.f32 %v427, %v925
        %v954 = vsub.f32 %v428, %v929
        %v955 = vsub.f32 %v429, %v929
        %v956 = vsub.f32 %v430, %v929
        %v957 = vsub.f32 %v431, %v929
        %v958 = vsub.f32 %v432, %v929
        %v959 = vsub.f32 %v433, %v929
        %v960 = vsub.f32 %v434, %v929
        %v961 = vsub.f32 %v435, %v929
        %v962 = vsub.f32 %v436, %v933
        %v963 = vsub.f32 %v437, %v933
        %v964 = vsub.f32 %v438, %v933
        %v965 = vsub.f32 %v439, %v933
        %v966 = vsub.f32 %v440, %v933
        %v967 = vsub.f32 %v441, %v933
        %v968 = vsub.f32 %v442, %v933
        %v969 = vsub.f32 %v443, %v933
        %v1034 = vlaneseq
        %v1035 = vshrl.u32 %v1034, 7
        %v1036 = vsub.s32 %v733, %v1035
        %v1037 = vrot.slane %v636, %v1036
        %v1038 = vlaneseq
        %v1039 = vshrl.u32 %v1038, 7
        %v1040 = vsub.s32 %v738, %v1039
        %v1041 = vrot.slane %v637, %v1040
        %v1042 = vsel %vm743, %v1041, %v1037
        %v1043 = vlaneseq
        %v1044 = vshrl.u32 %v1043, 7
        %v1045 = vsub.s32 %v745, %v1044
        %v1046 = vrot.slane %v638, %v1045
        %v1047 = vsel %vm750, %v1046, %v1042
        %v1048 = vlaneseq
        %v1049 = vshrl.u32 %v1048, 7
        %v1050 = vsub.s32 %v752, %v1049
        %v1051 = vrot.slane %v639, %v1050
        %v1052 = vsel %vm757, %v1051, %v1047
        %v1053 = vlaneseq
        %v1054 = vshrl.u32 %v1053, 7
        %v1055 = vsub.s32 %v759, %v1054
        %v1056 = vrot.slane %v640, %v1055
        %v1057 = vsel %vm764, %v1056, %v1052
        %v1058 = vlaneseq
        %v1059 = vshrl.u32 %v1058, 7
        %v1060 = vsub.s32 %v766, %v1059
        %v1061 = vrot.slane %v641, %v1060
        %v1062 = vsel %vm771, %v1061, %v1057
        %v1063 = vlaneseq
        %v1064 = vshrl.u32 %v1063, 7
        %v1065 = vsub.s32 %v773, %v1064
        %v1066 = vrot.slane %v642, %v1065
        %v1067 = vsel %vm778, %v1066, %v1062
        %v1068 = vlaneseq
        %v1069 = vshrl.u32 %v1068, 7
        %v1070 = vsub.s32 %v780, %v1069
        %v1071 = vrot.slane %v643, %v1070
        %v1072 = vsel %vm785, %v1071, %v1067
        %v1073 = vlaneseq
        %v1074 = vshrl.u32 %v1073, 7
        %v1075 = vsub.s32 %v733, %v1074
        %v1076 = vrot.slane %v644, %v1075
        %v1077 = vlaneseq
        %v1078 = vshrl.u32 %v1077, 7
        %v1079 = vsub.s32 %v738, %v1078
        %v1080 = vrot.slane %v645, %v1079
        %v1081 = vsel %vm743, %v1080, %v1076
        %v1082 = vlaneseq
        %v1083 = vshrl.u32 %v1082, 7
        %v1084 = vsub.s32 %v745, %v1083
        %v1085 = vrot.slane %v646, %v1084
        %v1086 = vsel %vm750, %v1085, %v1081
        %v1087 = vlaneseq
        %v1088 = vshrl.u32 %v1087, 7
        %v1089 = vsub.s32 %v752, %v1088
        %v1090 = vrot.slane %v647, %v1089
        %v1091 = vsel %vm757, %v1090, %v1086
        %v1092 = vlaneseq
        %v1093 = vshrl.u32 %v1092, 7
        %v1094 = vsub.s32 %v759, %v1093
        %v1095 = vrot.slane %v648, %v1094
        %v1096 = vsel %vm764, %v1095, %v1091
        %v1097 = vlaneseq
        %v1098 = vshrl.u32 %v1097, 7
        %v1099 = vsub.s32 %v766, %v1098
        %v1100 = vrot.slane %v649, %v1099
        %v1101 = vsel %vm771, %v1100, %v1096
        %v1102 = vlaneseq
        %v1103 = vshrl.u32 %v1102, 7
        %v1104 = vsub.s32 %v773, %v1103
        %v1105 = vrot.slane %v650, %v1104
        %v1106 = vsel %vm778, %v1105, %v1101
        %v1107 = vlaneseq
        %v1108 = vshrl.u32 %v1107, 7
        %v1109 = vsub.s32 %v780, %v1108
        %v1110 = vrot.slane %v651, %v1109
        %v1111 = vsel %vm785, %v1110, %v1106
        %v1112 = vlaneseq
        %v1113 = vshrl.u32 %v1112, 7
        %v1114 = vsub.s32 %v733, %v1113
        %v1115 = vrot.slane %v652, %v1114
        %v1116 = vlaneseq
        %v1117 = vshrl.u32 %v1116, 7
        %v1118 = vsub.s32 %v738, %v1117
        %v1119 = vrot.slane %v653, %v1118
        %v1120 = vsel %vm743, %v1119, %v1115
        %v1121 = vlaneseq
        %v1122 = vshrl.u32 %v1121, 7
        %v1123 = vsub.s32 %v745, %v1122
        %v1124 = vrot.slane %v654, %v1123
        %v1125 = vsel %vm750, %v1124, %v1120
        %v1126 = vlaneseq
        %v1127 = vshrl.u32 %v1126, 7
        %v1128 = vsub.s32 %v752, %v1127
        %v1129 = vrot.slane %v655, %v1128
        %v1130 = vsel %vm757, %v1129, %v1125
        %v1131 = vlaneseq
        %v1132 = vshrl.u32 %v1131, 7
        %v1133 = vsub.s32 %v759, %v1132
        %v1134 = vrot.slane %v656, %v1133
        %v1135 = vsel %vm764, %v1134, %v1130
        %v1136 = vlaneseq
        %v1137 = vshrl.u32 %v1136, 7
        %v1138 = vsub.s32 %v766, %v1137
        %v1139 = vrot.slane %v657, %v1138
        %v1140 = vsel %vm771, %v1139, %v1135
        %v1141 = vlaneseq
        %v1142 = vshrl.u32 %v1141, 7
        %v1143 = vsub.s32 %v773, %v1142
        %v1144 = vrot.slane %v658, %v1143
        %v1145 = vsel %vm778, %v1144, %v1140
        %v1146 = vlaneseq
        %v1147 = vshrl.u32 %v1146, 7
        %v1148 = vsub.s32 %v780, %v1147
        %v1149 = vrot.slane %v659, %v1148
        %v1150 = vsel %vm785, %v1149, %v1145
        %v1151 = vlaneseq
        %v1152 = vshrl.u32 %v1151, 7
        %v1153 = vsub.s32 %v733, %v1152
        %v1154 = vrot.slane %v660, %v1153
        %v1155 = vlaneseq
        %v1156 = vshrl.u32 %v1155, 7
        %v1157 = vsub.s32 %v738, %v1156
        %v1158 = vrot.slane %v661, %v1157
        %v1159 = vsel %vm743, %v1158, %v1154
        %v1160 = vlaneseq
        %v1161 = vshrl.u32 %v1160, 7
        %v1162 = vsub.s32 %v745, %v1161
        %v1163 = vrot.slane %v662, %v1162
        %v1164 = vsel %vm750, %v1163, %v1159
        %v1165 = vlaneseq
        %v1166 = vshrl.u32 %v1165, 7
        %v1167 = vsub.s32 %v752, %v1166
        %v1168 = vrot.slane %v663, %v1167
        %v1169 = vsel %vm757, %v1168, %v1164
        %v1170 = vlaneseq
        %v1171 = vshrl.u32 %v1170, 7
        %v1172 = vsub.s32 %v759, %v1171
        %v1173 = vrot.slane %v664, %v1172
        %v1174 = vsel %vm764, %v1173, %v1169
        %v1175 = vlaneseq
        %v1176 = vshrl.u32 %v1175, 7
        %v1177 = vsub.s32 %v766, %v1176
        %v1178 = vrot.slane %v665, %v1177
        %v1179 = vsel %vm771, %v1178, %v1174
        %v1180 = vlaneseq
        %v1181 = vshrl.u32 %v1180, 7
        %v1182 = vsub.s32 %v773, %v1181
        %v1183 = vrot.slane %v666, %v1182
        %v1184 = vsel %vm778, %v1183, %v1179
        %v1185 = vlaneseq
        %v1186 = vshrl.u32 %v1185, 7
        %v1187 = vsub.s32 %v780, %v1186
        %v1188 = vrot.slane %v667, %v1187
        %v1189 = vsel %vm785, %v1188, %v1184
        %v1190 = vlaneseq
        %v1191 = vshrl.u32 %v1190, 7
        %v1192 = vsub.s32 %v733, %v1191
        %v1193 = vrot.slane %v668, %v1192
        %v1194 = vlaneseq
        %v1195 = vshrl.u32 %v1194, 7
        %v1196 = vsub.s32 %v738, %v1195
        %v1197 = vrot.slane %v669, %v1196
        %v1198 = vsel %vm743, %v1197, %v1193
        %v1199 = vlaneseq
        %v1200 = vshrl.u32 %v1199, 7
        %v1201 = vsub.s32 %v745, %v1200
        %v1202 = vrot.slane %v670, %v1201
        %v1203 = vsel %vm750, %v1202, %v1198
        %v1204 = vlaneseq
        %v1205 = vshrl.u32 %v1204, 7
        %v1206 = vsub.s32 %v752, %v1205
        %v1207 = vrot.slane %v671, %v1206
        %v1208 = vsel %vm757, %v1207, %v1203
        %v1209 = vlaneseq
        %v1210 = vshrl.u32 %v1209, 7
        %v1211 = vsub.s32 %v759, %v1210
        %v1212 = vrot.slane %v672, %v1211
        %v1213 = vsel %vm764, %v1212, %v1208
        %v1214 = vlaneseq
        %v1215 = vshrl.u32 %v1214, 7
        %v1216 = vsub.s32 %v766, %v1215
        %v1217 = vrot.slane %v673, %v1216
        %v1218 = vsel %vm771, %v1217, %v1213
        %v1219 = vlaneseq
        %v1220 = vshrl.u32 %v1219, 7
        %v1221 = vsub.s32 %v773, %v1220
        %v1222 = vrot.slane %v674, %v1221
        %v1223 = vsel %vm778, %v1222, %v1218
        %v1224 = vlaneseq
        %v1225 = vshrl.u32 %v1224, 7
        %v1226 = vsub.s32 %v780, %v1225
        %v1227 = vrot.slane %v675, %v1226
        %v1228 = vsel %vm785, %v1227, %v1223
        %v1229 = vlaneseq
        %v1230 = vshrl.u32 %v1229, 7
        %v1231 = vsub.s32 %v733, %v1230
        %v1232 = vrot.slane %v676, %v1231
        %v1233 = vlaneseq
        %v1234 = vshrl.u32 %v1233, 7
        %v1235 = vsub.s32 %v738, %v1234
        %v1236 = vrot.slane %v677, %v1235
        %v1237 = vsel %vm743, %v1236, %v1232
        %v1238 = vlaneseq
        %v1239 = vshrl.u32 %v1238, 7
        %v1240 = vsub.s32 %v745, %v1239
        %v1241 = vrot.slane %v678, %v1240
        %v1242 = vsel %vm750, %v1241, %v1237
        %v1243 = vlaneseq
        %v1244 = vshrl.u32 %v1243, 7
        %v1245 = vsub.s32 %v752, %v1244
        %v1246 = vrot.slane %v679, %v1245
        %v1247 = vsel %vm757, %v1246, %v1242
        %v1248 = vlaneseq
        %v1249 = vshrl.u32 %v1248, 7
        %v1250 = vsub.s32 %v759, %v1249
        %v1251 = vrot.slane %v680, %v1250
        %v1252 = vsel %vm764, %v1251, %v1247
        %v1253 = vlaneseq
        %v1254 = vshrl.u32 %v1253, 7
        %v1255 = vsub.s32 %v766, %v1254
        %v1256 = vrot.slane %v681, %v1255
        %v1257 = vsel %vm771, %v1256, %v1252
        %v1258 = vlaneseq
        %v1259 = vshrl.u32 %v1258, 7
        %v1260 = vsub.s32 %v773, %v1259
        %v1261 = vrot.slane %v682, %v1260
        %v1262 = vsel %vm778, %v1261, %v1257
        %v1263 = vlaneseq
        %v1264 = vshrl.u32 %v1263, 7
        %v1265 = vsub.s32 %v780, %v1264
        %v1266 = vrot.slane %v683, %v1265
        %v1267 = vsel %vm785, %v1266, %v1262
        %v1268 = vlaneseq
        %v1269 = vshrl.u32 %v1268, 7
        %v1270 = vsub.s32 %v733, %v1269
        %v1271 = vrot.slane %v684, %v1270
        %v1272 = vlaneseq
        %v1273 = vshrl.u32 %v1272, 7
        %v1274 = vsub.s32 %v738, %v1273
        %v1275 = vrot.slane %v685, %v1274
        %v1276 = vsel %vm743, %v1275, %v1271
        %v1277 = vlaneseq
        %v1278 = vshrl.u32 %v1277, 7
        %v1279 = vsub.s32 %v745, %v1278
        %v1280 = vrot.slane %v686, %v1279
        %v1281 = vsel %vm750, %v1280, %v1276
        %v1282 = vlaneseq
        %v1283 = vshrl.u32 %v1282, 7
        %v1284 = vsub.s32 %v752, %v1283
        %v1285 = vrot.slane %v687, %v1284
        %v1286 = vsel %vm757, %v1285, %v1281
        %v1287 = vlaneseq
        %v1288 = vshrl.u32 %v1287, 7
        %v1289 = vsub.s32 %v759, %v1288
        %v1290 = vrot.slane %v688, %v1289
        %v1291 = vsel %vm764, %v1290, %v1286
        %v1292 = vlaneseq
        %v1293 = vshrl.u32 %v1292, 7
        %v1294 = vsub.s32 %v766, %v1293
        %v1295 = vrot.slane %v689, %v1294
        %v1296 = vsel %vm771, %v1295, %v1291
        %v1297 = vlaneseq
        %v1298 = vshrl.u32 %v1297, 7
        %v1299 = vsub.s32 %v773, %v1298
        %v1300 = vrot.slane %v690, %v1299
        %v1301 = vsel %vm778, %v1300, %v1296
        %v1302 = vlaneseq
        %v1303 = vshrl.u32 %v1302, 7
        %v1304 = vsub.s32 %v780, %v1303
        %v1305 = vrot.slane %v691, %v1304
        %v1306 = vsel %vm785, %v1305, %v1301
        %v1307 = vlaneseq
        %v1308 = vshrl.u32 %v1307, 7
        %v1309 = vsub.s32 %v733, %v1308
        %v1310 = vrot.slane %v692, %v1309
        %v1311 = vlaneseq
        %v1312 = vshrl.u32 %v1311, 7
        %v1313 = vsub.s32 %v738, %v1312
        %v1314 = vrot.slane %v693, %v1313
        %v1315 = vsel %vm743, %v1314, %v1310
        %v1316 = vlaneseq
        %v1317 = vshrl.u32 %v1316, 7
        %v1318 = vsub.s32 %v745, %v1317
        %v1319 = vrot.slane %v694, %v1318
        %v1320 = vsel %vm750, %v1319, %v1315
        %v1321 = vlaneseq
        %v1322 = vshrl.u32 %v1321, 7
        %v1323 = vsub.s32 %v752, %v1322
        %v1324 = vrot.slane %v695, %v1323
        %v1325 = vsel %vm757, %v1324, %v1320
        %v1326 = vlaneseq
        %v1327 = vshrl.u32 %v1326, 7
        %v1328 = vsub.s32 %v759, %v1327
        %v1329 = vrot.slane %v696, %v1328
        %v1330 = vsel %vm764, %v1329, %v1325
        %v1331 = vlaneseq
        %v1332 = vshrl.u32 %v1331, 7
        %v1333 = vsub.s32 %v766, %v1332
        %v1334 = vrot.slane %v697, %v1333
        %v1335 = vsel %vm771, %v1334, %v1330
        %v1336 = vlaneseq
        %v1337 = vshrl.u32 %v1336, 7
        %v1338 = vsub.s32 %v773, %v1337
        %v1339 = vrot.slane %v698, %v1338
        %v1340 = vsel %vm778, %v1339, %v1335
        %v1341 = vlaneseq
        %v1342 = vshrl.u32 %v1341, 7
        %v1343 = vsub.s32 %v780, %v1342
        %v1344 = vrot.slane %v699, %v1343
        %v1345 = vsel %vm785, %v1344, %v1340
        %v1346 = vsel %vm904, %v1111, %v1072
        %v1347 = vsel %vm906, %v1150, %v1346
        %v1348 = vsel %vm908, %v1189, %v1347
        %vm1349 = vcmask 1044484
        %v1350 = vsel %vm1349, %v1228, %v1348
        %vm1351 = vcmask 1045509
        %v1352 = vsel %vm1351, %v1267, %v1350
        %vm1353 = vcmask 1046534
        %v1354 = vsel %vm1353, %v1306, %v1352
        %vm1355 = vcmask 1047559
        %v1356 = vsel %vm1355, %v1345, %v1354
        %vm1358 = vcmask 523264
        %v1359 = vsel %vm1358, %v1356, 0.0
        %1360 = vadd.xlane.f32.xlu0 %v1359
        %v1361 = vpop.xlane.xlu0 %1360
        %v1362 = vmul.f32 %v1361, %v915
        %v1364 = vlaneseq
        %v1365 = vshrl.u32 %v1364, 7
        %v1366 = vsub.s32 0, %v1365
        %v1367 = vrot.slane %v1362, %v1366
        %v1368 = vlaneseq
        %v1369 = vshrl.u32 %v1368, 7
        %v1370 = vsub.s32 1, %v1369
        %v1371 = vrot.slane %v1362, %v1370
        %v1372 = vlaneseq
        %v1373 = vshrl.u32 %v1372, 7
        %v1374 = vsub.s32 2, %v1373
        %v1375 = vrot.slane %v1362, %v1374
        %v1376 = vlaneseq
        %v1377 = vshrl.u32 %v1376, 7
        %v1378 = vsub.s32 3, %v1377
        %v1379 = vrot.slane %v1362, %v1378
        %v1380 = vlaneseq
        %v1381 = vshrl.u32 %v1380, 7
        %v1382 = vsub.s32 4, %v1381
        %v1383 = vrot.slane %v1362, %v1382
        %v1384 = vlaneseq
        %v1385 = vshrl.u32 %v1384, 7
        %v1386 = vsub.s32 5, %v1385
        %v1387 = vrot.slane %v1362, %v1386
        %v1388 = vlaneseq
        %v1389 = vshrl.u32 %v1388, 7
        %v1390 = vsub.s32 6, %v1389
        %v1391 = vrot.slane %v1362, %v1390
        %v1392 = vlaneseq
        %v1393 = vshrl.u32 %v1392, 7
        %v1394 = vsub.s32 7, %v1393
        %v1395 = vrot.slane %v1362, %v1394
        %v1404 = vsub.f32 %v636, %v1367
        %v1405 = vsub.f32 %v637, %v1367
        %v1406 = vsub.f32 %v638, %v1367
        %v1407 = vsub.f32 %v639, %v1367
        %v1408 = vsub.f32 %v640, %v1367
        %v1409 = vsub.f32 %v641, %v1367
        %v1410 = vsub.f32 %v642, %v1367
        %v1411 = vsub.f32 %v643, %v1367
        %v1412 = vsub.f32 %v644, %v1371
        %v1413 = vsub.f32 %v645, %v1371
        %v1414 = vsub.f32 %v646, %v1371
        %v1415 = vsub.f32 %v647, %v1371
        %v1416 = vsub.f32 %v648, %v1371
        %v1417 = vsub.f32 %v649, %v1371
        %v1418 = vsub.f32 %v650, %v1371
        %v1419 = vsub.f32 %v651, %v1371
        %v1420 = vsub.f32 %v652, %v1375
        %v1421 = vsub.f32 %v653, %v1375
        %v1422 = vsub.f32 %v654, %v1375
        %v1423 = vsub.f32 %v655, %v1375
        %v1424 = vsub.f32 %v656, %v1375
        %v1425 = vsub.f32 %v657, %v1375
        %v1426 = vsub.f32 %v658, %v1375
        %v1427 = vsub.f32 %v659, %v1375
        %v1428 = vsub.f32 %v660, %v1379
        %v1429 = vsub.f32 %v661, %v1379
        %v1430 = vsub.f32 %v662, %v1379
        %v1431 = vsub.f32 %v663, %v1379
        %v1432 = vsub.f32 %v664, %v1379
        %v1433 = vsub.f32 %v665, %v1379
        %v1434 = vsub.f32 %v666, %v1379
        %v1435 = vsub.f32 %v667, %v1379
        %v1436 = vsub.f32 %v668, %v1383
        %v1437 = vsub.f32 %v669, %v1383
        %v1438 = vsub.f32 %v670, %v1383
        %v1439 = vsub.f32 %v671, %v1383
        %v1440 = vsub.f32 %v672, %v1383
        %v1441 = vsub.f32 %v673, %v1383
        %v1442 = vsub.f32 %v674, %v1383
        %v1443 = vsub.f32 %v675, %v1383
        %v1444 = vsub.f32 %v676, %v1387
        %v1445 = vsub.f32 %v677, %v1387
        %v1446 = vsub.f32 %v678, %v1387
        %v1447 = vsub.f32 %v679, %v1387
        %v1448 = vsub.f32 %v680, %v1387
        %v1449 = vsub.f32 %v681, %v1387
        %v1450 = vsub.f32 %v682, %v1387
        %v1451 = vsub.f32 %v683, %v1387
        %v1452 = vsub.f32 %v684, %v1391
        %v1453 = vsub.f32 %v685, %v1391
        %v1454 = vsub.f32 %v686, %v1391
        %v1455 = vsub.f32 %v687, %v1391
        %v1456 = vsub.f32 %v688, %v1391
        %v1457 = vsub.f32 %v689, %v1391
        %v1458 = vsub.f32 %v690, %v1391
        %v1459 = vsub.f32 %v691, %v1391
        %v1460 = vsub.f32 %v692, %v1395
        %v1461 = vsub.f32 %v693, %v1395
        %v1462 = vsub.f32 %v694, %v1395
        %v1463 = vsub.f32 %v695, %v1395
        %v1464 = vsub.f32 %v696, %v1395
        %v1465 = vsub.f32 %v697, %v1395
        %v1466 = vsub.f32 %v698, %v1395
        %v1467 = vsub.f32 %v699, %v1395
        %v1468 = vmul.f32 %v938, %v938
        %v1469 = vmul.f32 %v939, %v939
        %v1470 = vmul.f32 %v940, %v940
        %v1471 = vmul.f32 %v941, %v941
        %v1472 = vmul.f32 %v942, %v942
        %v1473 = vmul.f32 %v943, %v943
        %v1474 = vmul.f32 %v944, %v944
        %v1475 = vmul.f32 %v945, %v945
        %v1476 = vmul.f32 %v946, %v946
        %v1477 = vmul.f32 %v947, %v947
        %v1478 = vmul.f32 %v948, %v948
        %v1479 = vmul.f32 %v949, %v949
        %v1480 = vmul.f32 %v950, %v950
        %v1481 = vmul.f32 %v951, %v951
        %v1482 = vmul.f32 %v952, %v952
        %v1483 = vmul.f32 %v953, %v953
        %v1484 = vmul.f32 %v954, %v954
        %v1485 = vmul.f32 %v955, %v955
        %v1486 = vmul.f32 %v956, %v956
        %v1487 = vmul.f32 %v957, %v957
        %v1488 = vmul.f32 %v958, %v958
        %v1489 = vmul.f32 %v959, %v959
        %v1490 = vmul.f32 %v960, %v960
        %v1491 = vmul.f32 %v961, %v961
        %v1492 = vmul.f32 %v962, %v962
        %v1493 = vmul.f32 %v963, %v963
        %v1494 = vmul.f32 %v964, %v964
        %v1495 = vmul.f32 %v965, %v965
        %v1496 = vmul.f32 %v966, %v966
        %v1497 = vmul.f32 %v967, %v967
        %v1498 = vmul.f32 %v968, %v968
        %v1499 = vmul.f32 %v969, %v969
        %1532 = vset.pattern.permute.xlu0 0
        %1533 = vperm.xlu0 %1532, %v1468
        %v1534 = vpop.permute.xlu0 %1533
        %1535 = vset.pattern.permute.xlu0 0
        %1536 = vperm.xlu0 %1535, %v1469
        %v1537 = vpop.permute.xlu0 %1536
        %1538 = vset.pattern.permute.xlu0 0
        %1539 = vperm.xlu0 %1538, %v1470
        %v1540 = vpop.permute.xlu0 %1539
        %1541 = vset.pattern.permute.xlu0 0
        %1542 = vperm.xlu0 %1541, %v1471
        %v1543 = vpop.permute.xlu0 %1542
        %1544 = vset.pattern.permute.xlu0 0
        %1545 = vperm.xlu0 %1544, %v1472
        %v1546 = vpop.permute.xlu0 %1545
        %1547 = vset.pattern.permute.xlu0 0
        %1548 = vperm.xlu0 %1547, %v1473
        %v1549 = vpop.permute.xlu0 %1548
        %1550 = vset.pattern.permute.xlu0 0
        %1551 = vperm.xlu0 %1550, %v1474
        %v1552 = vpop.permute.xlu0 %1551
        %1553 = vset.pattern.permute.xlu0 0
        %1554 = vperm.xlu0 %1553, %v1475
        %v1555 = vpop.permute.xlu0 %1554
        %1556 = vset.pattern.permute.xlu0 0
        %1557 = vperm.xlu0 %1556, %v1476
        %v1558 = vpop.permute.xlu0 %1557
        %1559 = vset.pattern.permute.xlu0 0
        %1560 = vperm.xlu0 %1559, %v1477
        %v1561 = vpop.permute.xlu0 %1560
        %1562 = vset.pattern.permute.xlu0 0
        %1563 = vperm.xlu0 %1562, %v1478
        %v1564 = vpop.permute.xlu0 %1563
        %1565 = vset.pattern.permute.xlu0 0
        %1566 = vperm.xlu0 %1565, %v1479
        %v1567 = vpop.permute.xlu0 %1566
        %1568 = vset.pattern.permute.xlu0 0
        %1569 = vperm.xlu0 %1568, %v1480
        %v1570 = vpop.permute.xlu0 %1569
        %1571 = vset.pattern.permute.xlu0 0
        %1572 = vperm.xlu0 %1571, %v1481
        %v1573 = vpop.permute.xlu0 %1572
        %1574 = vset.pattern.permute.xlu0 0
        %1575 = vperm.xlu0 %1574, %v1482
        %v1576 = vpop.permute.xlu0 %1575
        %1577 = vset.pattern.permute.xlu0 0
        %1578 = vperm.xlu0 %1577, %v1483
        %v1579 = vpop.permute.xlu0 %1578
        %1580 = vset.pattern.permute.xlu0 0
        %1581 = vperm.xlu0 %1580, %v1484
        %v1582 = vpop.permute.xlu0 %1581
        %1583 = vset.pattern.permute.xlu0 0
        %1584 = vperm.xlu0 %1583, %v1485
        %v1585 = vpop.permute.xlu0 %1584
        %1586 = vset.pattern.permute.xlu0 0
        %1587 = vperm.xlu0 %1586, %v1486
        %v1588 = vpop.permute.xlu0 %1587
        %1589 = vset.pattern.permute.xlu0 0
        %1590 = vperm.xlu0 %1589, %v1487
        %v1591 = vpop.permute.xlu0 %1590
        %1592 = vset.pattern.permute.xlu0 0
        %1593 = vperm.xlu0 %1592, %v1488
        %v1594 = vpop.permute.xlu0 %1593
        %1595 = vset.pattern.permute.xlu0 0
        %1596 = vperm.xlu0 %1595, %v1489
        %v1597 = vpop.permute.xlu0 %1596
        %1598 = vset.pattern.permute.xlu0 0
        %1599 = vperm.xlu0 %1598, %v1490
        %v1600 = vpop.permute.xlu0 %1599
        %1601 = vset.pattern.permute.xlu0 0
        %1602 = vperm.xlu0 %1601, %v1491
        %v1603 = vpop.permute.xlu0 %1602
        %1604 = vset.pattern.permute.xlu0 0
        %1605 = vperm.xlu0 %1604, %v1492
        %v1606 = vpop.permute.xlu0 %1605
        %1607 = vset.pattern.permute.xlu0 0
        %1608 = vperm.xlu0 %1607, %v1493
        %v1609 = vpop.permute.xlu0 %1608
        %1610 = vset.pattern.permute.xlu0 0
        %1611 = vperm.xlu0 %1610, %v1494
        %v1612 = vpop.permute.xlu0 %1611
        %1613 = vset.pattern.permute.xlu0 0
        %1614 = vperm.xlu0 %1613, %v1495
        %v1615 = vpop.permute.xlu0 %1614
        %1616 = vset.pattern.permute.xlu0 0
        %1617 = vperm.xlu0 %1616, %v1496
        %v1618 = vpop.permute.xlu0 %1617
        %1619 = vset.pattern.permute.xlu0 0
        %1620 = vperm.xlu0 %1619, %v1497
        %v1621 = vpop.permute.xlu0 %1620
        %1622 = vset.pattern.permute.xlu0 0
        %1623 = vperm.xlu0 %1622, %v1498
        %v1624 = vpop.permute.xlu0 %1623
        %1625 = vset.pattern.permute.xlu0 0
        %1626 = vperm.xlu0 %1625, %v1499
        %v1627 = vpop.permute.xlu0 %1626
        %v1628 = vlaneseq
        %v1629 = vshrl.u32 %v1628, 7
        %v1630 = vsub.s32 %v733, %v1629
        %v1631 = vrot.slane %v1534, %v1630
        %v1632 = vlaneseq
        %v1633 = vshrl.u32 %v1632, 7
        %v1634 = vsub.s32 %v738, %v1633
        %v1635 = vrot.slane %v1537, %v1634
        %v1636 = vsel %vm743, %v1635, %v1631
        %v1637 = vlaneseq
        %v1638 = vshrl.u32 %v1637, 7
        %v1639 = vsub.s32 %v745, %v1638
        %v1640 = vrot.slane %v1540, %v1639
        %v1641 = vsel %vm750, %v1640, %v1636
        %v1642 = vlaneseq
        %v1643 = vshrl.u32 %v1642, 7
        %v1644 = vsub.s32 %v752, %v1643
        %v1645 = vrot.slane %v1543, %v1644
        %v1646 = vsel %vm757, %v1645, %v1641
        %v1647 = vlaneseq
        %v1648 = vshrl.u32 %v1647, 7
        %v1649 = vsub.s32 %v759, %v1648
        %v1650 = vrot.slane %v1546, %v1649
        %v1651 = vsel %vm764, %v1650, %v1646
        %v1652 = vlaneseq
        %v1653 = vshrl.u32 %v1652, 7
        %v1654 = vsub.s32 %v766, %v1653
        %v1655 = vrot.slane %v1549, %v1654
        %v1656 = vsel %vm771, %v1655, %v1651
        %v1657 = vlaneseq
        %v1658 = vshrl.u32 %v1657, 7
        %v1659 = vsub.s32 %v773, %v1658
        %v1660 = vrot.slane %v1552, %v1659
        %v1661 = vsel %vm778, %v1660, %v1656
        %v1662 = vlaneseq
        %v1663 = vshrl.u32 %v1662, 7
        %v1664 = vsub.s32 %v780, %v1663
        %v1665 = vrot.slane %v1555, %v1664
        %v1666 = vsel %vm785, %v1665, %v1661
        %v1667 = vlaneseq
        %v1668 = vshrl.u32 %v1667, 7
        %v1669 = vsub.s32 %v733, %v1668
        %v1670 = vrot.slane %v1558, %v1669
        %v1671 = vlaneseq
        %v1672 = vshrl.u32 %v1671, 7
        %v1673 = vsub.s32 %v738, %v1672
        %v1674 = vrot.slane %v1561, %v1673
        %v1675 = vsel %vm743, %v1674, %v1670
        %v1676 = vlaneseq
        %v1677 = vshrl.u32 %v1676, 7
        %v1678 = vsub.s32 %v745, %v1677
        %v1679 = vrot.slane %v1564, %v1678
        %v1680 = vsel %vm750, %v1679, %v1675
        %v1681 = vlaneseq
        %v1682 = vshrl.u32 %v1681, 7
        %v1683 = vsub.s32 %v752, %v1682
        %v1684 = vrot.slane %v1567, %v1683
        %v1685 = vsel %vm757, %v1684, %v1680
        %v1686 = vlaneseq
        %v1687 = vshrl.u32 %v1686, 7
        %v1688 = vsub.s32 %v759, %v1687
        %v1689 = vrot.slane %v1570, %v1688
        %v1690 = vsel %vm764, %v1689, %v1685
        %v1691 = vlaneseq
        %v1692 = vshrl.u32 %v1691, 7
        %v1693 = vsub.s32 %v766, %v1692
        %v1694 = vrot.slane %v1573, %v1693
        %v1695 = vsel %vm771, %v1694, %v1690
        %v1696 = vlaneseq
        %v1697 = vshrl.u32 %v1696, 7
        %v1698 = vsub.s32 %v773, %v1697
        %v1699 = vrot.slane %v1576, %v1698
        %v1700 = vsel %vm778, %v1699, %v1695
        %v1701 = vlaneseq
        %v1702 = vshrl.u32 %v1701, 7
        %v1703 = vsub.s32 %v780, %v1702
        %v1704 = vrot.slane %v1579, %v1703
        %v1705 = vsel %vm785, %v1704, %v1700
        %v1706 = vlaneseq
        %v1707 = vshrl.u32 %v1706, 7
        %v1708 = vsub.s32 %v733, %v1707
        %v1709 = vrot.slane %v1582, %v1708
        %v1710 = vlaneseq
        %v1711 = vshrl.u32 %v1710, 7
        %v1712 = vsub.s32 %v738, %v1711
        %v1713 = vrot.slane %v1585, %v1712
        %v1714 = vsel %vm743, %v1713, %v1709
        %v1715 = vlaneseq
        %v1716 = vshrl.u32 %v1715, 7
        %v1717 = vsub.s32 %v745, %v1716
        %v1718 = vrot.slane %v1588, %v1717
        %v1719 = vsel %vm750, %v1718, %v1714
        %v1720 = vlaneseq
        %v1721 = vshrl.u32 %v1720, 7
        %v1722 = vsub.s32 %v752, %v1721
        %v1723 = vrot.slane %v1591, %v1722
        %v1724 = vsel %vm757, %v1723, %v1719
        %v1725 = vlaneseq
        %v1726 = vshrl.u32 %v1725, 7
        %v1727 = vsub.s32 %v759, %v1726
        %v1728 = vrot.slane %v1594, %v1727
        %v1729 = vsel %vm764, %v1728, %v1724
        %v1730 = vlaneseq
        %v1731 = vshrl.u32 %v1730, 7
        %v1732 = vsub.s32 %v766, %v1731
        %v1733 = vrot.slane %v1597, %v1732
        %v1734 = vsel %vm771, %v1733, %v1729
        %v1735 = vlaneseq
        %v1736 = vshrl.u32 %v1735, 7
        %v1737 = vsub.s32 %v773, %v1736
        %v1738 = vrot.slane %v1600, %v1737
        %v1739 = vsel %vm778, %v1738, %v1734
        %v1740 = vlaneseq
        %v1741 = vshrl.u32 %v1740, 7
        %v1742 = vsub.s32 %v780, %v1741
        %v1743 = vrot.slane %v1603, %v1742
        %v1744 = vsel %vm785, %v1743, %v1739
        %v1745 = vlaneseq
        %v1746 = vshrl.u32 %v1745, 7
        %v1747 = vsub.s32 %v733, %v1746
        %v1748 = vrot.slane %v1606, %v1747
        %v1749 = vlaneseq
        %v1750 = vshrl.u32 %v1749, 7
        %v1751 = vsub.s32 %v738, %v1750
        %v1752 = vrot.slane %v1609, %v1751
        %v1753 = vsel %vm743, %v1752, %v1748
        %v1754 = vlaneseq
        %v1755 = vshrl.u32 %v1754, 7
        %v1756 = vsub.s32 %v745, %v1755
        %v1757 = vrot.slane %v1612, %v1756
        %v1758 = vsel %vm750, %v1757, %v1753
        %v1759 = vlaneseq
        %v1760 = vshrl.u32 %v1759, 7
        %v1761 = vsub.s32 %v752, %v1760
        %v1762 = vrot.slane %v1615, %v1761
        %v1763 = vsel %vm757, %v1762, %v1758
        %v1764 = vlaneseq
        %v1765 = vshrl.u32 %v1764, 7
        %v1766 = vsub.s32 %v759, %v1765
        %v1767 = vrot.slane %v1618, %v1766
        %v1768 = vsel %vm764, %v1767, %v1763
        %v1769 = vlaneseq
        %v1770 = vshrl.u32 %v1769, 7
        %v1771 = vsub.s32 %v766, %v1770
        %v1772 = vrot.slane %v1621, %v1771
        %v1773 = vsel %vm771, %v1772, %v1768
        %v1774 = vlaneseq
        %v1775 = vshrl.u32 %v1774, 7
        %v1776 = vsub.s32 %v773, %v1775
        %v1777 = vrot.slane %v1624, %v1776
        %v1778 = vsel %vm778, %v1777, %v1773
        %v1779 = vlaneseq
        %v1780 = vshrl.u32 %v1779, 7
        %v1781 = vsub.s32 %v780, %v1780
        %v1782 = vrot.slane %v1627, %v1781
        %v1783 = vsel %vm785, %v1782, %v1778
        %v1784 = vsel %vm904, %v1705, %v1666
        %v1785 = vsel %vm906, %v1744, %v1784
        %v1786 = vsel %vm908, %v1783, %v1785
        %v1788 = vsel %vm911, %v1786, 0.0
        %1789 = vadd.xlane.f32.xlu0 %v1788
        %v1790 = vpop.xlane.xlu0 %1789
        %v1791 = vrsqrt.pop %v1790
        %v1792 = vmul.f32 %v1790, %v1791
        %vm1793 = vcmp.eq.f32.partialorder %v1790, inf
        %v1794 = vsel %vm1793, %v1790, %v1792
        %vm1795 = vcmp.eq.f32.partialorder %v1790, 0.0
        %v1796 = vand.u32 %v1790, 2147483648
        %v1797 = vsel %vm1795, %v1796, %v1794
        %v1798 = vmax.f32 %v1797, 1e-08
        %v1799 = vmul.f32 %v1404, %v1404
        %v1800 = vmul.f32 %v1405, %v1405
        %v1801 = vmul.f32 %v1406, %v1406
        %v1802 = vmul.f32 %v1407, %v1407
        %v1803 = vmul.f32 %v1408, %v1408
        %v1804 = vmul.f32 %v1409, %v1409
        %v1805 = vmul.f32 %v1410, %v1410
        %v1806 = vmul.f32 %v1411, %v1411
        %v1807 = vmul.f32 %v1412, %v1412
        %v1808 = vmul.f32 %v1413, %v1413
        %v1809 = vmul.f32 %v1414, %v1414
        %v1810 = vmul.f32 %v1415, %v1415
        %v1811 = vmul.f32 %v1416, %v1416
        %v1812 = vmul.f32 %v1417, %v1417
        %v1813 = vmul.f32 %v1418, %v1418
        %v1814 = vmul.f32 %v1419, %v1419
        %v1815 = vmul.f32 %v1420, %v1420
        %v1816 = vmul.f32 %v1421, %v1421
        %v1817 = vmul.f32 %v1422, %v1422
        %v1818 = vmul.f32 %v1423, %v1423
        %v1819 = vmul.f32 %v1424, %v1424
        %v1820 = vmul.f32 %v1425, %v1425
        %v1821 = vmul.f32 %v1426, %v1426
        %v1822 = vmul.f32 %v1427, %v1427
        %v1823 = vmul.f32 %v1428, %v1428
        %v1824 = vmul.f32 %v1429, %v1429
        %v1825 = vmul.f32 %v1430, %v1430
        %v1826 = vmul.f32 %v1431, %v1431
        %v1827 = vmul.f32 %v1432, %v1432
        %v1828 = vmul.f32 %v1433, %v1433
        %v1829 = vmul.f32 %v1434, %v1434
        %v1830 = vmul.f32 %v1435, %v1435
        %v1831 = vmul.f32 %v1436, %v1436
        %v1832 = vmul.f32 %v1437, %v1437
        %v1833 = vmul.f32 %v1438, %v1438
        %v1834 = vmul.f32 %v1439, %v1439
        %v1835 = vmul.f32 %v1440, %v1440
        %v1836 = vmul.f32 %v1441, %v1441
        %v1837 = vmul.f32 %v1442, %v1442
        %v1838 = vmul.f32 %v1443, %v1443
        %v1839 = vmul.f32 %v1444, %v1444
        %v1840 = vmul.f32 %v1445, %v1445
        %v1841 = vmul.f32 %v1446, %v1446
        %v1842 = vmul.f32 %v1447, %v1447
        %v1843 = vmul.f32 %v1448, %v1448
        %v1844 = vmul.f32 %v1449, %v1449
        %v1845 = vmul.f32 %v1450, %v1450
        %v1846 = vmul.f32 %v1451, %v1451
        %v1847 = vmul.f32 %v1452, %v1452
        %v1848 = vmul.f32 %v1453, %v1453
        %v1849 = vmul.f32 %v1454, %v1454
        %v1850 = vmul.f32 %v1455, %v1455
        %v1851 = vmul.f32 %v1456, %v1456
        %v1852 = vmul.f32 %v1457, %v1457
        %v1853 = vmul.f32 %v1458, %v1458
        %v1854 = vmul.f32 %v1459, %v1459
        %v1855 = vmul.f32 %v1460, %v1460
        %v1856 = vmul.f32 %v1461, %v1461
        %v1857 = vmul.f32 %v1462, %v1462
        %v1858 = vmul.f32 %v1463, %v1463
        %v1859 = vmul.f32 %v1464, %v1464
        %v1860 = vmul.f32 %v1465, %v1465
        %v1861 = vmul.f32 %v1466, %v1466
        %v1862 = vmul.f32 %v1467, %v1467
        %1927 = vset.pattern.permute.xlu0 0
        %1928 = vperm.xlu0 %1927, %v1799
        %v1929 = vpop.permute.xlu0 %1928
        %1930 = vset.pattern.permute.xlu0 0
        %1931 = vperm.xlu0 %1930, %v1800
        %v1932 = vpop.permute.xlu0 %1931
        %1933 = vset.pattern.permute.xlu0 0
        %1934 = vperm.xlu0 %1933, %v1801
        %v1935 = vpop.permute.xlu0 %1934
        %1936 = vset.pattern.permute.xlu0 0
        %1937 = vperm.xlu0 %1936, %v1802
        %v1938 = vpop.permute.xlu0 %1937
        %1939 = vset.pattern.permute.xlu0 0
        %1940 = vperm.xlu0 %1939, %v1803
        %v1941 = vpop.permute.xlu0 %1940
        %1942 = vset.pattern.permute.xlu0 0
        %1943 = vperm.xlu0 %1942, %v1804
        %v1944 = vpop.permute.xlu0 %1943
        %1945 = vset.pattern.permute.xlu0 0
        %1946 = vperm.xlu0 %1945, %v1805
        %v1947 = vpop.permute.xlu0 %1946
        %1948 = vset.pattern.permute.xlu0 0
        %1949 = vperm.xlu0 %1948, %v1806
        %v1950 = vpop.permute.xlu0 %1949
        %1951 = vset.pattern.permute.xlu0 0
        %1952 = vperm.xlu0 %1951, %v1807
        %v1953 = vpop.permute.xlu0 %1952
        %1954 = vset.pattern.permute.xlu0 0
        %1955 = vperm.xlu0 %1954, %v1808
        %v1956 = vpop.permute.xlu0 %1955
        %1957 = vset.pattern.permute.xlu0 0
        %1958 = vperm.xlu0 %1957, %v1809
        %v1959 = vpop.permute.xlu0 %1958
        %1960 = vset.pattern.permute.xlu0 0
        %1961 = vperm.xlu0 %1960, %v1810
        %v1962 = vpop.permute.xlu0 %1961
        %1963 = vset.pattern.permute.xlu0 0
        %1964 = vperm.xlu0 %1963, %v1811
        %v1965 = vpop.permute.xlu0 %1964
        %1966 = vset.pattern.permute.xlu0 0
        %1967 = vperm.xlu0 %1966, %v1812
        %v1968 = vpop.permute.xlu0 %1967
        %1969 = vset.pattern.permute.xlu0 0
        %1970 = vperm.xlu0 %1969, %v1813
        %v1971 = vpop.permute.xlu0 %1970
        %1972 = vset.pattern.permute.xlu0 0
        %1973 = vperm.xlu0 %1972, %v1814
        %v1974 = vpop.permute.xlu0 %1973
        %1975 = vset.pattern.permute.xlu0 0
        %1976 = vperm.xlu0 %1975, %v1815
        %v1977 = vpop.permute.xlu0 %1976
        %1978 = vset.pattern.permute.xlu0 0
        %1979 = vperm.xlu0 %1978, %v1816
        %v1980 = vpop.permute.xlu0 %1979
        %1981 = vset.pattern.permute.xlu0 0
        %1982 = vperm.xlu0 %1981, %v1817
        %v1983 = vpop.permute.xlu0 %1982
        %1984 = vset.pattern.permute.xlu0 0
        %1985 = vperm.xlu0 %1984, %v1818
        %v1986 = vpop.permute.xlu0 %1985
        %1987 = vset.pattern.permute.xlu0 0
        %1988 = vperm.xlu0 %1987, %v1819
        %v1989 = vpop.permute.xlu0 %1988
        %1990 = vset.pattern.permute.xlu0 0
        %1991 = vperm.xlu0 %1990, %v1820
        %v1992 = vpop.permute.xlu0 %1991
        %1993 = vset.pattern.permute.xlu0 0
        %1994 = vperm.xlu0 %1993, %v1821
        %v1995 = vpop.permute.xlu0 %1994
        %1996 = vset.pattern.permute.xlu0 0
        %1997 = vperm.xlu0 %1996, %v1822
        %v1998 = vpop.permute.xlu0 %1997
        %1999 = vset.pattern.permute.xlu0 0
        %2000 = vperm.xlu0 %1999, %v1823
        %v2001 = vpop.permute.xlu0 %2000
        %2002 = vset.pattern.permute.xlu0 0
        %2003 = vperm.xlu0 %2002, %v1824
        %v2004 = vpop.permute.xlu0 %2003
        %2005 = vset.pattern.permute.xlu0 0
        %2006 = vperm.xlu0 %2005, %v1825
        %v2007 = vpop.permute.xlu0 %2006
        %2008 = vset.pattern.permute.xlu0 0
        %2009 = vperm.xlu0 %2008, %v1826
        %v2010 = vpop.permute.xlu0 %2009
        %2011 = vset.pattern.permute.xlu0 0
        %2012 = vperm.xlu0 %2011, %v1827
        %v2013 = vpop.permute.xlu0 %2012
        %2014 = vset.pattern.permute.xlu0 0
        %2015 = vperm.xlu0 %2014, %v1828
        %v2016 = vpop.permute.xlu0 %2015
        %2017 = vset.pattern.permute.xlu0 0
        %2018 = vperm.xlu0 %2017, %v1829
        %v2019 = vpop.permute.xlu0 %2018
        %2020 = vset.pattern.permute.xlu0 0
        %2021 = vperm.xlu0 %2020, %v1830
        %v2022 = vpop.permute.xlu0 %2021
        %2023 = vset.pattern.permute.xlu0 0
        %2024 = vperm.xlu0 %2023, %v1831
        %v2025 = vpop.permute.xlu0 %2024
        %2026 = vset.pattern.permute.xlu0 0
        %2027 = vperm.xlu0 %2026, %v1832
        %v2028 = vpop.permute.xlu0 %2027
        %2029 = vset.pattern.permute.xlu0 0
        %2030 = vperm.xlu0 %2029, %v1833
        %v2031 = vpop.permute.xlu0 %2030
        %2032 = vset.pattern.permute.xlu0 0
        %2033 = vperm.xlu0 %2032, %v1834
        %v2034 = vpop.permute.xlu0 %2033
        %2035 = vset.pattern.permute.xlu0 0
        %2036 = vperm.xlu0 %2035, %v1835
        %v2037 = vpop.permute.xlu0 %2036
        %2038 = vset.pattern.permute.xlu0 0
        %2039 = vperm.xlu0 %2038, %v1836
        %v2040 = vpop.permute.xlu0 %2039
        %2041 = vset.pattern.permute.xlu0 0
        %2042 = vperm.xlu0 %2041, %v1837
        %v2043 = vpop.permute.xlu0 %2042
        %2044 = vset.pattern.permute.xlu0 0
        %2045 = vperm.xlu0 %2044, %v1838
        %v2046 = vpop.permute.xlu0 %2045
        %2047 = vset.pattern.permute.xlu0 0
        %2048 = vperm.xlu0 %2047, %v1839
        %v2049 = vpop.permute.xlu0 %2048
        %2050 = vset.pattern.permute.xlu0 0
        %2051 = vperm.xlu0 %2050, %v1840
        %v2052 = vpop.permute.xlu0 %2051
        %2053 = vset.pattern.permute.xlu0 0
        %2054 = vperm.xlu0 %2053, %v1841
        %v2055 = vpop.permute.xlu0 %2054
        %2056 = vset.pattern.permute.xlu0 0
        %2057 = vperm.xlu0 %2056, %v1842
        %v2058 = vpop.permute.xlu0 %2057
        %2059 = vset.pattern.permute.xlu0 0
        %2060 = vperm.xlu0 %2059, %v1843
        %v2061 = vpop.permute.xlu0 %2060
        %2062 = vset.pattern.permute.xlu0 0
        %2063 = vperm.xlu0 %2062, %v1844
        %v2064 = vpop.permute.xlu0 %2063
        %2065 = vset.pattern.permute.xlu0 0
        %2066 = vperm.xlu0 %2065, %v1845
        %v2067 = vpop.permute.xlu0 %2066
        %2068 = vset.pattern.permute.xlu0 0
        %2069 = vperm.xlu0 %2068, %v1846
        %v2070 = vpop.permute.xlu0 %2069
        %2071 = vset.pattern.permute.xlu0 0
        %2072 = vperm.xlu0 %2071, %v1847
        %v2073 = vpop.permute.xlu0 %2072
        %2074 = vset.pattern.permute.xlu0 0
        %2075 = vperm.xlu0 %2074, %v1848
        %v2076 = vpop.permute.xlu0 %2075
        %2077 = vset.pattern.permute.xlu0 0
        %2078 = vperm.xlu0 %2077, %v1849
        %v2079 = vpop.permute.xlu0 %2078
        %2080 = vset.pattern.permute.xlu0 0
        %2081 = vperm.xlu0 %2080, %v1850
        %v2082 = vpop.permute.xlu0 %2081
        %2083 = vset.pattern.permute.xlu0 0
        %2084 = vperm.xlu0 %2083, %v1851
        %v2085 = vpop.permute.xlu0 %2084
        %2086 = vset.pattern.permute.xlu0 0
        %2087 = vperm.xlu0 %2086, %v1852
        %v2088 = vpop.permute.xlu0 %2087
        %2089 = vset.pattern.permute.xlu0 0
        %2090 = vperm.xlu0 %2089, %v1853
        %v2091 = vpop.permute.xlu0 %2090
        %2092 = vset.pattern.permute.xlu0 0
        %2093 = vperm.xlu0 %2092, %v1854
        %v2094 = vpop.permute.xlu0 %2093
        %2095 = vset.pattern.permute.xlu0 0
        %2096 = vperm.xlu0 %2095, %v1855
        %v2097 = vpop.permute.xlu0 %2096
        %2098 = vset.pattern.permute.xlu0 0
        %2099 = vperm.xlu0 %2098, %v1856
        %v2100 = vpop.permute.xlu0 %2099
        %2101 = vset.pattern.permute.xlu0 0
        %2102 = vperm.xlu0 %2101, %v1857
        %v2103 = vpop.permute.xlu0 %2102
        %2104 = vset.pattern.permute.xlu0 0
        %2105 = vperm.xlu0 %2104, %v1858
        %v2106 = vpop.permute.xlu0 %2105
        %2107 = vset.pattern.permute.xlu0 0
        %2108 = vperm.xlu0 %2107, %v1859
        %v2109 = vpop.permute.xlu0 %2108
        %2110 = vset.pattern.permute.xlu0 0
        %2111 = vperm.xlu0 %2110, %v1860
        %v2112 = vpop.permute.xlu0 %2111
        %2113 = vset.pattern.permute.xlu0 0
        %2114 = vperm.xlu0 %2113, %v1861
        %v2115 = vpop.permute.xlu0 %2114
        %2116 = vset.pattern.permute.xlu0 0
        %2117 = vperm.xlu0 %2116, %v1862
        %v2118 = vpop.permute.xlu0 %2117
        %v2119 = vlaneseq
        %v2120 = vshrl.u32 %v2119, 7
        %v2121 = vsub.s32 %v733, %v2120
        %v2122 = vrot.slane %v1929, %v2121
        %v2123 = vlaneseq
        %v2124 = vshrl.u32 %v2123, 7
        %v2125 = vsub.s32 %v738, %v2124
        %v2126 = vrot.slane %v1932, %v2125
        %v2127 = vsel %vm743, %v2126, %v2122
        %v2128 = vlaneseq
        %v2129 = vshrl.u32 %v2128, 7
        %v2130 = vsub.s32 %v745, %v2129
        %v2131 = vrot.slane %v1935, %v2130
        %v2132 = vsel %vm750, %v2131, %v2127
        %v2133 = vlaneseq
        %v2134 = vshrl.u32 %v2133, 7
        %v2135 = vsub.s32 %v752, %v2134
        %v2136 = vrot.slane %v1938, %v2135
        %v2137 = vsel %vm757, %v2136, %v2132
        %v2138 = vlaneseq
        %v2139 = vshrl.u32 %v2138, 7
        %v2140 = vsub.s32 %v759, %v2139
        %v2141 = vrot.slane %v1941, %v2140
        %v2142 = vsel %vm764, %v2141, %v2137
        %v2143 = vlaneseq
        %v2144 = vshrl.u32 %v2143, 7
        %v2145 = vsub.s32 %v766, %v2144
        %v2146 = vrot.slane %v1944, %v2145
        %v2147 = vsel %vm771, %v2146, %v2142
        %v2148 = vlaneseq
        %v2149 = vshrl.u32 %v2148, 7
        %v2150 = vsub.s32 %v773, %v2149
        %v2151 = vrot.slane %v1947, %v2150
        %v2152 = vsel %vm778, %v2151, %v2147
        %v2153 = vlaneseq
        %v2154 = vshrl.u32 %v2153, 7
        %v2155 = vsub.s32 %v780, %v2154
        %v2156 = vrot.slane %v1950, %v2155
        %v2157 = vsel %vm785, %v2156, %v2152
        %v2158 = vlaneseq
        %v2159 = vshrl.u32 %v2158, 7
        %v2160 = vsub.s32 %v733, %v2159
        %v2161 = vrot.slane %v1953, %v2160
        %v2162 = vlaneseq
        %v2163 = vshrl.u32 %v2162, 7
        %v2164 = vsub.s32 %v738, %v2163
        %v2165 = vrot.slane %v1956, %v2164
        %v2166 = vsel %vm743, %v2165, %v2161
        %v2167 = vlaneseq
        %v2168 = vshrl.u32 %v2167, 7
        %v2169 = vsub.s32 %v745, %v2168
        %v2170 = vrot.slane %v1959, %v2169
        %v2171 = vsel %vm750, %v2170, %v2166
        %v2172 = vlaneseq
        %v2173 = vshrl.u32 %v2172, 7
        %v2174 = vsub.s32 %v752, %v2173
        %v2175 = vrot.slane %v1962, %v2174
        %v2176 = vsel %vm757, %v2175, %v2171
        %v2177 = vlaneseq
        %v2178 = vshrl.u32 %v2177, 7
        %v2179 = vsub.s32 %v759, %v2178
        %v2180 = vrot.slane %v1965, %v2179
        %v2181 = vsel %vm764, %v2180, %v2176
        %v2182 = vlaneseq
        %v2183 = vshrl.u32 %v2182, 7
        %v2184 = vsub.s32 %v766, %v2183
        %v2185 = vrot.slane %v1968, %v2184
        %v2186 = vsel %vm771, %v2185, %v2181
        %v2187 = vlaneseq
        %v2188 = vshrl.u32 %v2187, 7
        %v2189 = vsub.s32 %v773, %v2188
        %v2190 = vrot.slane %v1971, %v2189
        %v2191 = vsel %vm778, %v2190, %v2186
        %v2192 = vlaneseq
        %v2193 = vshrl.u32 %v2192, 7
        %v2194 = vsub.s32 %v780, %v2193
        %v2195 = vrot.slane %v1974, %v2194
        %v2196 = vsel %vm785, %v2195, %v2191
        %v2197 = vlaneseq
        %v2198 = vshrl.u32 %v2197, 7
        %v2199 = vsub.s32 %v733, %v2198
        %v2200 = vrot.slane %v1977, %v2199
        %v2201 = vlaneseq
        %v2202 = vshrl.u32 %v2201, 7
        %v2203 = vsub.s32 %v738, %v2202
        %v2204 = vrot.slane %v1980, %v2203
        %v2205 = vsel %vm743, %v2204, %v2200
        %v2206 = vlaneseq
        %v2207 = vshrl.u32 %v2206, 7
        %v2208 = vsub.s32 %v745, %v2207
        %v2209 = vrot.slane %v1983, %v2208
        %v2210 = vsel %vm750, %v2209, %v2205
        %v2211 = vlaneseq
        %v2212 = vshrl.u32 %v2211, 7
        %v2213 = vsub.s32 %v752, %v2212
        %v2214 = vrot.slane %v1986, %v2213
        %v2215 = vsel %vm757, %v2214, %v2210
        %v2216 = vlaneseq
        %v2217 = vshrl.u32 %v2216, 7
        %v2218 = vsub.s32 %v759, %v2217
        %v2219 = vrot.slane %v1989, %v2218
        %v2220 = vsel %vm764, %v2219, %v2215
        %v2221 = vlaneseq
        %v2222 = vshrl.u32 %v2221, 7
        %v2223 = vsub.s32 %v766, %v2222
        %v2224 = vrot.slane %v1992, %v2223
        %v2225 = vsel %vm771, %v2224, %v2220
        %v2226 = vlaneseq
        %v2227 = vshrl.u32 %v2226, 7
        %v2228 = vsub.s32 %v773, %v2227
        %v2229 = vrot.slane %v1995, %v2228
        %v2230 = vsel %vm778, %v2229, %v2225
        %v2231 = vlaneseq
        %v2232 = vshrl.u32 %v2231, 7
        %v2233 = vsub.s32 %v780, %v2232
        %v2234 = vrot.slane %v1998, %v2233
        %v2235 = vsel %vm785, %v2234, %v2230
        %v2236 = vlaneseq
        %v2237 = vshrl.u32 %v2236, 7
        %v2238 = vsub.s32 %v733, %v2237
        %v2239 = vrot.slane %v2001, %v2238
        %v2240 = vlaneseq
        %v2241 = vshrl.u32 %v2240, 7
        %v2242 = vsub.s32 %v738, %v2241
        %v2243 = vrot.slane %v2004, %v2242
        %v2244 = vsel %vm743, %v2243, %v2239
        %v2245 = vlaneseq
        %v2246 = vshrl.u32 %v2245, 7
        %v2247 = vsub.s32 %v745, %v2246
        %v2248 = vrot.slane %v2007, %v2247
        %v2249 = vsel %vm750, %v2248, %v2244
        %v2250 = vlaneseq
        %v2251 = vshrl.u32 %v2250, 7
        %v2252 = vsub.s32 %v752, %v2251
        %v2253 = vrot.slane %v2010, %v2252
        %v2254 = vsel %vm757, %v2253, %v2249
        %v2255 = vlaneseq
        %v2256 = vshrl.u32 %v2255, 7
        %v2257 = vsub.s32 %v759, %v2256
        %v2258 = vrot.slane %v2013, %v2257
        %v2259 = vsel %vm764, %v2258, %v2254
        %v2260 = vlaneseq
        %v2261 = vshrl.u32 %v2260, 7
        %v2262 = vsub.s32 %v766, %v2261
        %v2263 = vrot.slane %v2016, %v2262
        %v2264 = vsel %vm771, %v2263, %v2259
        %v2265 = vlaneseq
        %v2266 = vshrl.u32 %v2265, 7
        %v2267 = vsub.s32 %v773, %v2266
        %v2268 = vrot.slane %v2019, %v2267
        %v2269 = vsel %vm778, %v2268, %v2264
        %v2270 = vlaneseq
        %v2271 = vshrl.u32 %v2270, 7
        %v2272 = vsub.s32 %v780, %v2271
        %v2273 = vrot.slane %v2022, %v2272
        %v2274 = vsel %vm785, %v2273, %v2269
        %v2275 = vlaneseq
        %v2276 = vshrl.u32 %v2275, 7
        %v2277 = vsub.s32 %v733, %v2276
        %v2278 = vrot.slane %v2025, %v2277
        %v2279 = vlaneseq
        %v2280 = vshrl.u32 %v2279, 7
        %v2281 = vsub.s32 %v738, %v2280
        %v2282 = vrot.slane %v2028, %v2281
        %v2283 = vsel %vm743, %v2282, %v2278
        %v2284 = vlaneseq
        %v2285 = vshrl.u32 %v2284, 7
        %v2286 = vsub.s32 %v745, %v2285
        %v2287 = vrot.slane %v2031, %v2286
        %v2288 = vsel %vm750, %v2287, %v2283
        %v2289 = vlaneseq
        %v2290 = vshrl.u32 %v2289, 7
        %v2291 = vsub.s32 %v752, %v2290
        %v2292 = vrot.slane %v2034, %v2291
        %v2293 = vsel %vm757, %v2292, %v2288
        %v2294 = vlaneseq
        %v2295 = vshrl.u32 %v2294, 7
        %v2296 = vsub.s32 %v759, %v2295
        %v2297 = vrot.slane %v2037, %v2296
        %v2298 = vsel %vm764, %v2297, %v2293
        %v2299 = vlaneseq
        %v2300 = vshrl.u32 %v2299, 7
        %v2301 = vsub.s32 %v766, %v2300
        %v2302 = vrot.slane %v2040, %v2301
        %v2303 = vsel %vm771, %v2302, %v2298
        %v2304 = vlaneseq
        %v2305 = vshrl.u32 %v2304, 7
        %v2306 = vsub.s32 %v773, %v2305
        %v2307 = vrot.slane %v2043, %v2306
        %v2308 = vsel %vm778, %v2307, %v2303
        %v2309 = vlaneseq
        %v2310 = vshrl.u32 %v2309, 7
        %v2311 = vsub.s32 %v780, %v2310
        %v2312 = vrot.slane %v2046, %v2311
        %v2313 = vsel %vm785, %v2312, %v2308
        %v2314 = vlaneseq
        %v2315 = vshrl.u32 %v2314, 7
        %v2316 = vsub.s32 %v733, %v2315
        %v2317 = vrot.slane %v2049, %v2316
        %v2318 = vlaneseq
        %v2319 = vshrl.u32 %v2318, 7
        %v2320 = vsub.s32 %v738, %v2319
        %v2321 = vrot.slane %v2052, %v2320
        %v2322 = vsel %vm743, %v2321, %v2317
        %v2323 = vlaneseq
        %v2324 = vshrl.u32 %v2323, 7
        %v2325 = vsub.s32 %v745, %v2324
        %v2326 = vrot.slane %v2055, %v2325
        %v2327 = vsel %vm750, %v2326, %v2322
        %v2328 = vlaneseq
        %v2329 = vshrl.u32 %v2328, 7
        %v2330 = vsub.s32 %v752, %v2329
        %v2331 = vrot.slane %v2058, %v2330
        %v2332 = vsel %vm757, %v2331, %v2327
        %v2333 = vlaneseq
        %v2334 = vshrl.u32 %v2333, 7
        %v2335 = vsub.s32 %v759, %v2334
        %v2336 = vrot.slane %v2061, %v2335
        %v2337 = vsel %vm764, %v2336, %v2332
        %v2338 = vlaneseq
        %v2339 = vshrl.u32 %v2338, 7
        %v2340 = vsub.s32 %v766, %v2339
        %v2341 = vrot.slane %v2064, %v2340
        %v2342 = vsel %vm771, %v2341, %v2337
        %v2343 = vlaneseq
        %v2344 = vshrl.u32 %v2343, 7
        %v2345 = vsub.s32 %v773, %v2344
        %v2346 = vrot.slane %v2067, %v2345
        %v2347 = vsel %vm778, %v2346, %v2342
        %v2348 = vlaneseq
        %v2349 = vshrl.u32 %v2348, 7
        %v2350 = vsub.s32 %v780, %v2349
        %v2351 = vrot.slane %v2070, %v2350
        %v2352 = vsel %vm785, %v2351, %v2347
        %v2353 = vlaneseq
        %v2354 = vshrl.u32 %v2353, 7
        %v2355 = vsub.s32 %v733, %v2354
        %v2356 = vrot.slane %v2073, %v2355
        %v2357 = vlaneseq
        %v2358 = vshrl.u32 %v2357, 7
        %v2359 = vsub.s32 %v738, %v2358
        %v2360 = vrot.slane %v2076, %v2359
        %v2361 = vsel %vm743, %v2360, %v2356
        %v2362 = vlaneseq
        %v2363 = vshrl.u32 %v2362, 7
        %v2364 = vsub.s32 %v745, %v2363
        %v2365 = vrot.slane %v2079, %v2364
        %v2366 = vsel %vm750, %v2365, %v2361
        %v2367 = vlaneseq
        %v2368 = vshrl.u32 %v2367, 7
        %v2369 = vsub.s32 %v752, %v2368
        %v2370 = vrot.slane %v2082, %v2369
        %v2371 = vsel %vm757, %v2370, %v2366
        %v2372 = vlaneseq
        %v2373 = vshrl.u32 %v2372, 7
        %v2374 = vsub.s32 %v759, %v2373
        %v2375 = vrot.slane %v2085, %v2374
        %v2376 = vsel %vm764, %v2375, %v2371
        %v2377 = vlaneseq
        %v2378 = vshrl.u32 %v2377, 7
        %v2379 = vsub.s32 %v766, %v2378
        %v2380 = vrot.slane %v2088, %v2379
        %v2381 = vsel %vm771, %v2380, %v2376
        %v2382 = vlaneseq
        %v2383 = vshrl.u32 %v2382, 7
        %v2384 = vsub.s32 %v773, %v2383
        %v2385 = vrot.slane %v2091, %v2384
        %v2386 = vsel %vm778, %v2385, %v2381
        %v2387 = vlaneseq
        %v2388 = vshrl.u32 %v2387, 7
        %v2389 = vsub.s32 %v780, %v2388
        %v2390 = vrot.slane %v2094, %v2389
        %v2391 = vsel %vm785, %v2390, %v2386
        %v2392 = vlaneseq
        %v2393 = vshrl.u32 %v2392, 7
        %v2394 = vsub.s32 %v733, %v2393
        %v2395 = vrot.slane %v2097, %v2394
        %v2396 = vlaneseq
        %v2397 = vshrl.u32 %v2396, 7
        %v2398 = vsub.s32 %v738, %v2397
        %v2399 = vrot.slane %v2100, %v2398
        %v2400 = vsel %vm743, %v2399, %v2395
        %v2401 = vlaneseq
        %v2402 = vshrl.u32 %v2401, 7
        %v2403 = vsub.s32 %v745, %v2402
        %v2404 = vrot.slane %v2103, %v2403
        %v2405 = vsel %vm750, %v2404, %v2400
        %v2406 = vlaneseq
        %v2407 = vshrl.u32 %v2406, 7
        %v2408 = vsub.s32 %v752, %v2407
        %v2409 = vrot.slane %v2106, %v2408
        %v2410 = vsel %vm757, %v2409, %v2405
        %v2411 = vlaneseq
        %v2412 = vshrl.u32 %v2411, 7
        %v2413 = vsub.s32 %v759, %v2412
        %v2414 = vrot.slane %v2109, %v2413
        %v2415 = vsel %vm764, %v2414, %v2410
        %v2416 = vlaneseq
        %v2417 = vshrl.u32 %v2416, 7
        %v2418 = vsub.s32 %v766, %v2417
        %v2419 = vrot.slane %v2112, %v2418
        %v2420 = vsel %vm771, %v2419, %v2415
        %v2421 = vlaneseq
        %v2422 = vshrl.u32 %v2421, 7
        %v2423 = vsub.s32 %v773, %v2422
        %v2424 = vrot.slane %v2115, %v2423
        %v2425 = vsel %vm778, %v2424, %v2420
        %v2426 = vlaneseq
        %v2427 = vshrl.u32 %v2426, 7
        %v2428 = vsub.s32 %v780, %v2427
        %v2429 = vrot.slane %v2118, %v2428
        %v2430 = vsel %vm785, %v2429, %v2425
        %v2431 = vsel %vm904, %v2196, %v2157
        %v2432 = vsel %vm906, %v2235, %v2431
        %v2433 = vsel %vm908, %v2274, %v2432
        %v2434 = vsel %vm1349, %v2313, %v2433
        %v2435 = vsel %vm1351, %v2352, %v2434
        %v2436 = vsel %vm1353, %v2391, %v2435
        %v2437 = vsel %vm1355, %v2430, %v2436
        %v2439 = vsel %vm1358, %v2437, 0.0
        %2440 = vadd.xlane.f32.xlu0 %v2439
        %v2441 = vpop.xlane.xlu0 %2440
        %v2442 = vrsqrt.pop %v2441
        %v2443 = vmul.f32 %v2441, %v2442
        %vm2444 = vcmp.eq.f32.partialorder %v2441, inf
        %v2445 = vsel %vm2444, %v2441, %v2443
        %vm2446 = vcmp.eq.f32.partialorder %v2441, 0.0
        %v2447 = vand.u32 %v2441, 2147483648
        %v2448 = vsel %vm2446, %v2447, %v2445
        %v2449 = vmax.f32 %v2448, 1e-08
        %v2450 = vrcp.pop %v1798
        %v2451 = vrcp.pop %v2449
        %v2452 = vmul.f32 %v1798, %v2450
        %v2453 = vsub.f32 2.0, %v2452
        %v2454 = vmul.f32 %v2450, %v2453
        %v2455 = vmul.f32 %v2449, %v2451
        %v2456 = vsub.f32 2.0, %v2455
        %v2457 = vmul.f32 %v2451, %v2456
        %s2458 = sld [smem:[#allocation4]]
        %2459 = vst.msk [vmem:[#allocation2] sm:$0xff] %vm1358, 0.0
        %2460 = vst.msk [vmem:[#allocation2 + $0x8] sm:$0xff] %vm1358, 0.0
        %2461 = vst.msk [vmem:[#allocation2 + $0x10] sm:$0xff] %vm1358, 0.0
        %2462 = vst.msk [vmem:[#allocation2 + $0x18] sm:$0xff] %vm1358, 0.0
        %2463 = vst.msk [vmem:[#allocation2 + $0x20] sm:$0xff] %vm1358, 0.0
        %2464 = vst.msk [vmem:[#allocation2 + $0x28] sm:$0xff] %vm1358, 0.0
        %2465 = vst.msk [vmem:[#allocation2 + $0x30] sm:$0xff] %vm1358, 0.0
        %2466 = vst.msk [vmem:[#allocation2 + $0x38] sm:$0xff] %vm1358, 0.0
        %2467 = vst.msk [vmem:[#allocation2 + $0x40] sm:$0xff] %vm1358, 0.0
        %2468 = vst.msk [vmem:[#allocation2 + $0x48] sm:$0xff] %vm1358, 0.0
        %2469 = vst.msk [vmem:[#allocation2 + $0x50] sm:$0xff] %vm1358, 0.0
        %2470 = vst.msk [vmem:[#allocation2 + $0x58] sm:$0xff] %vm1358, 0.0
        %2471 = vst.msk [vmem:[#allocation2 + $0x60] sm:$0xff] %vm1358, 0.0
        %2472 = vst.msk [vmem:[#allocation2 + $0x68] sm:$0xff] %vm1358, 0.0
        %2473 = vst.msk [vmem:[#allocation2 + $0x70] sm:$0xff] %vm1358, 0.0
        %2474 = vst.msk [vmem:[#allocation2 + $0x78] sm:$0xff] %vm1358, 0.0
        %v2475 = vstv %s2458
        %v2476 = vmul.f32 %v2454, %v2475
        %v2478 = vlaneseq
        %v2479 = vshrl.u32 %v2478, 7
        %v2480 = vsub.s32 0, %v2479
        %v2481 = vrot.slane %v2476, %v2480
        %v2482 = vlaneseq
        %v2483 = vshrl.u32 %v2482, 7
        %v2484 = vsub.s32 1, %v2483
        %v2485 = vrot.slane %v2476, %v2484
        %v2486 = vlaneseq
        %v2487 = vshrl.u32 %v2486, 7
        %v2488 = vsub.s32 2, %v2487
        %v2489 = vrot.slane %v2476, %v2488
        %v2490 = vlaneseq
        %v2491 = vshrl.u32 %v2490, 7
        %v2492 = vsub.s32 3, %v2491
        %v2493 = vrot.slane %v2476, %v2492
        %v2498 = vmul.f32 %v938, %v2481
        %v2499 = vmul.f32 %v939, %v2481
        %v2500 = vmul.f32 %v940, %v2481
        %v2501 = vmul.f32 %v941, %v2481
        %v2502 = vmul.f32 %v942, %v2481
        %v2503 = vmul.f32 %v943, %v2481
        %v2504 = vmul.f32 %v944, %v2481
        %v2505 = vmul.f32 %v945, %v2481
        %v2506 = vmul.f32 %v946, %v2485
        %v2507 = vmul.f32 %v947, %v2485
        %v2508 = vmul.f32 %v948, %v2485
        %v2509 = vmul.f32 %v949, %v2485
        %v2510 = vmul.f32 %v950, %v2485
        %v2511 = vmul.f32 %v951, %v2485
        %v2512 = vmul.f32 %v952, %v2485
        %v2513 = vmul.f32 %v953, %v2485
        %v2514 = vmul.f32 %v954, %v2489
        %v2515 = vmul.f32 %v955, %v2489
        %v2516 = vmul.f32 %v956, %v2489
        %v2517 = vmul.f32 %v957, %v2489
        %v2518 = vmul.f32 %v958, %v2489
        %v2519 = vmul.f32 %v959, %v2489
        %v2520 = vmul.f32 %v960, %v2489
        %v2521 = vmul.f32 %v961, %v2489
        %v2522 = vmul.f32 %v962, %v2493
        %v2523 = vmul.f32 %v963, %v2493
        %v2524 = vmul.f32 %v964, %v2493
        %v2525 = vmul.f32 %v965, %v2493
        %v2526 = vmul.f32 %v966, %v2493
        %v2527 = vmul.f32 %v967, %v2493
        %v2528 = vmul.f32 %v968, %v2493
        %v2529 = vmul.f32 %v969, %v2493
        %2562 = vset.pattern.permute.xlu0 0
        %2563 = vperm.xlu0 %2562, %v2498
        %v2564 = vpop.permute.xlu0 %2563
        %2565 = vset.pattern.permute.xlu0 0
        %2566 = vperm.xlu0 %2565, %v2499
        %v2567 = vpop.permute.xlu0 %2566
        %2568 = vset.pattern.permute.xlu0 0
        %2569 = vperm.xlu0 %2568, %v2500
        %v2570 = vpop.permute.xlu0 %2569
        %2571 = vset.pattern.permute.xlu0 0
        %2572 = vperm.xlu0 %2571, %v2501
        %v2573 = vpop.permute.xlu0 %2572
        %2574 = vset.pattern.permute.xlu0 0
        %2575 = vperm.xlu0 %2574, %v2502
        %v2576 = vpop.permute.xlu0 %2575
        %2577 = vset.pattern.permute.xlu0 0
        %2578 = vperm.xlu0 %2577, %v2503
        %v2579 = vpop.permute.xlu0 %2578
        %2580 = vset.pattern.permute.xlu0 0
        %2581 = vperm.xlu0 %2580, %v2504
        %v2582 = vpop.permute.xlu0 %2581
        %2583 = vset.pattern.permute.xlu0 0
        %2584 = vperm.xlu0 %2583, %v2505
        %v2585 = vpop.permute.xlu0 %2584
        %2586 = vset.pattern.permute.xlu0 0
        %2587 = vperm.xlu0 %2586, %v2506
        %v2588 = vpop.permute.xlu0 %2587
        %2589 = vset.pattern.permute.xlu0 0
        %2590 = vperm.xlu0 %2589, %v2507
        %v2591 = vpop.permute.xlu0 %2590
        %2592 = vset.pattern.permute.xlu0 0
        %2593 = vperm.xlu0 %2592, %v2508
        %v2594 = vpop.permute.xlu0 %2593
        %2595 = vset.pattern.permute.xlu0 0
        %2596 = vperm.xlu0 %2595, %v2509
        %v2597 = vpop.permute.xlu0 %2596
        %2598 = vset.pattern.permute.xlu0 0
        %2599 = vperm.xlu0 %2598, %v2510
        %v2600 = vpop.permute.xlu0 %2599
        %2601 = vset.pattern.permute.xlu0 0
        %2602 = vperm.xlu0 %2601, %v2511
        %v2603 = vpop.permute.xlu0 %2602
        %2604 = vset.pattern.permute.xlu0 0
        %2605 = vperm.xlu0 %2604, %v2512
        %v2606 = vpop.permute.xlu0 %2605
        %2607 = vset.pattern.permute.xlu0 0
        %2608 = vperm.xlu0 %2607, %v2513
        %v2609 = vpop.permute.xlu0 %2608
        %2610 = vset.pattern.permute.xlu0 0
        %2611 = vperm.xlu0 %2610, %v2514
        %v2612 = vpop.permute.xlu0 %2611
        %2613 = vset.pattern.permute.xlu0 0
        %2614 = vperm.xlu0 %2613, %v2515
        %v2615 = vpop.permute.xlu0 %2614
        %2616 = vset.pattern.permute.xlu0 0
        %2617 = vperm.xlu0 %2616, %v2516
        %v2618 = vpop.permute.xlu0 %2617
        %2619 = vset.pattern.permute.xlu0 0
        %2620 = vperm.xlu0 %2619, %v2517
        %v2621 = vpop.permute.xlu0 %2620
        %2622 = vset.pattern.permute.xlu0 0
        %2623 = vperm.xlu0 %2622, %v2518
        %v2624 = vpop.permute.xlu0 %2623
        %2625 = vset.pattern.permute.xlu0 0
        %2626 = vperm.xlu0 %2625, %v2519
        %v2627 = vpop.permute.xlu0 %2626
        %2628 = vset.pattern.permute.xlu0 0
        %2629 = vperm.xlu0 %2628, %v2520
        %v2630 = vpop.permute.xlu0 %2629
        %2631 = vset.pattern.permute.xlu0 0
        %2632 = vperm.xlu0 %2631, %v2521
        %v2633 = vpop.permute.xlu0 %2632
        %2634 = vset.pattern.permute.xlu0 0
        %2635 = vperm.xlu0 %2634, %v2522
        %v2636 = vpop.permute.xlu0 %2635
        %2637 = vset.pattern.permute.xlu0 0
        %2638 = vperm.xlu0 %2637, %v2523
        %v2639 = vpop.permute.xlu0 %2638
        %2640 = vset.pattern.permute.xlu0 0
        %2641 = vperm.xlu0 %2640, %v2524
        %v2642 = vpop.permute.xlu0 %2641
        %2643 = vset.pattern.permute.xlu0 0
        %2644 = vperm.xlu0 %2643, %v2525
        %v2645 = vpop.permute.xlu0 %2644
        %2646 = vset.pattern.permute.xlu0 0
        %2647 = vperm.xlu0 %2646, %v2526
        %v2648 = vpop.permute.xlu0 %2647
        %2649 = vset.pattern.permute.xlu0 0
        %2650 = vperm.xlu0 %2649, %v2527
        %v2651 = vpop.permute.xlu0 %2650
        %2652 = vset.pattern.permute.xlu0 0
        %2653 = vperm.xlu0 %2652, %v2528
        %v2654 = vpop.permute.xlu0 %2653
        %2655 = vset.pattern.permute.xlu0 0
        %2656 = vperm.xlu0 %2655, %v2529
        %v2657 = vpop.permute.xlu0 %2656
        %v2658 = vlaneseq
        %v2659 = vshrl.u32 %v2658, 7
        %v2660 = vsub.s32 %v733, %v2659
        %v2661 = vrot.slane %v2564, %v2660
        %v2662 = vlaneseq
        %v2663 = vshrl.u32 %v2662, 7
        %v2664 = vsub.s32 %v738, %v2663
        %v2665 = vrot.slane %v2567, %v2664
        %v2666 = vsel %vm743, %v2665, %v2661
        %v2667 = vlaneseq
        %v2668 = vshrl.u32 %v2667, 7
        %v2669 = vsub.s32 %v745, %v2668
        %v2670 = vrot.slane %v2570, %v2669
        %v2671 = vsel %vm750, %v2670, %v2666
        %v2672 = vlaneseq
        %v2673 = vshrl.u32 %v2672, 7
        %v2674 = vsub.s32 %v752, %v2673
        %v2675 = vrot.slane %v2573, %v2674
        %v2676 = vsel %vm757, %v2675, %v2671
        %v2677 = vlaneseq
        %v2678 = vshrl.u32 %v2677, 7
        %v2679 = vsub.s32 %v759, %v2678
        %v2680 = vrot.slane %v2576, %v2679
        %v2681 = vsel %vm764, %v2680, %v2676
        %v2682 = vlaneseq
        %v2683 = vshrl.u32 %v2682, 7
        %v2684 = vsub.s32 %v766, %v2683
        %v2685 = vrot.slane %v2579, %v2684
        %v2686 = vsel %vm771, %v2685, %v2681
        %v2687 = vlaneseq
        %v2688 = vshrl.u32 %v2687, 7
        %v2689 = vsub.s32 %v773, %v2688
        %v2690 = vrot.slane %v2582, %v2689
        %v2691 = vsel %vm778, %v2690, %v2686
        %v2692 = vlaneseq
        %v2693 = vshrl.u32 %v2692, 7
        %v2694 = vsub.s32 %v780, %v2693
        %v2695 = vrot.slane %v2585, %v2694
        %v2696 = vsel %vm785, %v2695, %v2691
        %v2697 = vlaneseq
        %v2698 = vshrl.u32 %v2697, 7
        %v2699 = vsub.s32 %v733, %v2698
        %v2700 = vrot.slane %v2588, %v2699
        %v2701 = vlaneseq
        %v2702 = vshrl.u32 %v2701, 7
        %v2703 = vsub.s32 %v738, %v2702
        %v2704 = vrot.slane %v2591, %v2703
        %v2705 = vsel %vm743, %v2704, %v2700
        %v2706 = vlaneseq
        %v2707 = vshrl.u32 %v2706, 7
        %v2708 = vsub.s32 %v745, %v2707
        %v2709 = vrot.slane %v2594, %v2708
        %v2710 = vsel %vm750, %v2709, %v2705
        %v2711 = vlaneseq
        %v2712 = vshrl.u32 %v2711, 7
        %v2713 = vsub.s32 %v752, %v2712
        %v2714 = vrot.slane %v2597, %v2713
        %v2715 = vsel %vm757, %v2714, %v2710
        %v2716 = vlaneseq
        %v2717 = vshrl.u32 %v2716, 7
        %v2718 = vsub.s32 %v759, %v2717
        %v2719 = vrot.slane %v2600, %v2718
        %v2720 = vsel %vm764, %v2719, %v2715
        %v2721 = vlaneseq
        %v2722 = vshrl.u32 %v2721, 7
        %v2723 = vsub.s32 %v766, %v2722
        %v2724 = vrot.slane %v2603, %v2723
        %v2725 = vsel %vm771, %v2724, %v2720
        %v2726 = vlaneseq
        %v2727 = vshrl.u32 %v2726, 7
        %v2728 = vsub.s32 %v773, %v2727
        %v2729 = vrot.slane %v2606, %v2728
        %v2730 = vsel %vm778, %v2729, %v2725
        %v2731 = vlaneseq
        %v2732 = vshrl.u32 %v2731, 7
        %v2733 = vsub.s32 %v780, %v2732
        %v2734 = vrot.slane %v2609, %v2733
        %v2735 = vsel %vm785, %v2734, %v2730
        %v2736 = vlaneseq
        %v2737 = vshrl.u32 %v2736, 7
        %v2738 = vsub.s32 %v733, %v2737
        %v2739 = vrot.slane %v2612, %v2738
        %v2740 = vlaneseq
        %v2741 = vshrl.u32 %v2740, 7
        %v2742 = vsub.s32 %v738, %v2741
        %v2743 = vrot.slane %v2615, %v2742
        %v2744 = vsel %vm743, %v2743, %v2739
        %v2745 = vlaneseq
        %v2746 = vshrl.u32 %v2745, 7
        %v2747 = vsub.s32 %v745, %v2746
        %v2748 = vrot.slane %v2618, %v2747
        %v2749 = vsel %vm750, %v2748, %v2744
        %v2750 = vlaneseq
        %v2751 = vshrl.u32 %v2750, 7
        %v2752 = vsub.s32 %v752, %v2751
        %v2753 = vrot.slane %v2621, %v2752
        %v2754 = vsel %vm757, %v2753, %v2749
        %v2755 = vlaneseq
        %v2756 = vshrl.u32 %v2755, 7
        %v2757 = vsub.s32 %v759, %v2756
        %v2758 = vrot.slane %v2624, %v2757
        %v2759 = vsel %vm764, %v2758, %v2754
        %v2760 = vlaneseq
        %v2761 = vshrl.u32 %v2760, 7
        %v2762 = vsub.s32 %v766, %v2761
        %v2763 = vrot.slane %v2627, %v2762
        %v2764 = vsel %vm771, %v2763, %v2759
        %v2765 = vlaneseq
        %v2766 = vshrl.u32 %v2765, 7
        %v2767 = vsub.s32 %v773, %v2766
        %v2768 = vrot.slane %v2630, %v2767
        %v2769 = vsel %vm778, %v2768, %v2764
        %v2770 = vlaneseq
        %v2771 = vshrl.u32 %v2770, 7
        %v2772 = vsub.s32 %v780, %v2771
        %v2773 = vrot.slane %v2633, %v2772
        %v2774 = vsel %vm785, %v2773, %v2769
        %v2775 = vlaneseq
        %v2776 = vshrl.u32 %v2775, 7
        %v2777 = vsub.s32 %v733, %v2776
        %v2778 = vrot.slane %v2636, %v2777
        %v2779 = vlaneseq
        %v2780 = vshrl.u32 %v2779, 7
        %v2781 = vsub.s32 %v738, %v2780
        %v2782 = vrot.slane %v2639, %v2781
        %v2783 = vsel %vm743, %v2782, %v2778
        %v2784 = vlaneseq
        %v2785 = vshrl.u32 %v2784, 7
        %v2786 = vsub.s32 %v745, %v2785
        %v2787 = vrot.slane %v2642, %v2786
        %v2788 = vsel %vm750, %v2787, %v2783
        %v2789 = vlaneseq
        %v2790 = vshrl.u32 %v2789, 7
        %v2791 = vsub.s32 %v752, %v2790
        %v2792 = vrot.slane %v2645, %v2791
        %v2793 = vsel %vm757, %v2792, %v2788
        %v2794 = vlaneseq
        %v2795 = vshrl.u32 %v2794, 7
        %v2796 = vsub.s32 %v759, %v2795
        %v2797 = vrot.slane %v2648, %v2796
        %v2798 = vsel %vm764, %v2797, %v2793
        %v2799 = vlaneseq
        %v2800 = vshrl.u32 %v2799, 7
        %v2801 = vsub.s32 %v766, %v2800
        %v2802 = vrot.slane %v2651, %v2801
        %v2803 = vsel %vm771, %v2802, %v2798
        %v2804 = vlaneseq
        %v2805 = vshrl.u32 %v2804, 7
        %v2806 = vsub.s32 %v773, %v2805
        %v2807 = vrot.slane %v2654, %v2806
        %v2808 = vsel %vm778, %v2807, %v2803
        %v2809 = vlaneseq
        %v2810 = vshrl.u32 %v2809, 7
        %v2811 = vsub.s32 %v780, %v2810
        %v2812 = vrot.slane %v2657, %v2811
        %v2813 = vsel %vm785, %v2812, %v2808
        %v2814 = vsel %vm904, %v2735, %v2696
        %v2815 = vsel %vm906, %v2774, %v2814
        %v2816 = vsel %vm908, %v2813, %v2815
        %2818 = vst.msk [vmem:[#allocation2] sm:$0xf] %vm911, %v2816
        %v2819 = vld [vmem:[%s3] sm:$0xff]
        %v2820 = vld [vmem:[%s3 + $0x8] sm:$0xff]
        %2821 = vst.msk [vmem:[#allocation2 + $0x8] sm:$0xff] %vm1358, %v2819
        %2822 = vst.msk [vmem:[#allocation2 + $0x10] sm:$0xff] %vm1358, %v2820
        %v2823 = vld [vmem:[#allocation2] sm:$0xff]
        %v2824 = vld [vmem:[#allocation2 + $0x8] sm:$0xff]
        %v2825 = vld [vmem:[#allocation2 + $0x10] sm:$0xff]
        %v2826 = vld [vmem:[#allocation2 + $0x18] sm:$0xff]
        %v2827 = vld [vmem:[#allocation2 + $0x20] sm:$0xff]
        %v2828 = vld [vmem:[#allocation2 + $0x28] sm:$0xff]
        %v2829 = vld [vmem:[#allocation2 + $0x30] sm:$0xff]
        %v2830 = vld [vmem:[#allocation2 + $0x38] sm:$0xff]
        %v2831 = vld [vmem:[#allocation2 + $0x40] sm:$0xff]
        %v2832 = vld [vmem:[#allocation2 + $0x48] sm:$0xff]
        %v2833 = vld [vmem:[#allocation2 + $0x50] sm:$0xff]
        %v2834 = vld [vmem:[#allocation2 + $0x58] sm:$0xff]
        %v2835 = vld [vmem:[#allocation2 + $0x60] sm:$0xff]
        %v2836 = vld [vmem:[#allocation2 + $0x68] sm:$0xff]
        %v2837 = vld [vmem:[#allocation2 + $0x70] sm:$0xff]
        %v2838 = vld [vmem:[#allocation2 + $0x78] sm:$0xff]
        %v2839 = vsel %vm1358, %v1356, 0
        %v2842 = vsel %vm1358, %v2823, 0
        %v2845 = vsel %vm1358, %v2824, 0
        %v2848 = vsel %vm1358, %v2825, 0
        %v2851 = vsel %vm1358, %v2826, 0
        %v2854 = vsel %vm1358, %v2827, 0
        %v2857 = vsel %vm1358, %v2828, 0
        %v2860 = vsel %vm1358, %v2829, 0
        %v2863 = vsel %vm1358, %v2830, 0
        %v2866 = vsel %vm1358, %v2831, 0
        %v2869 = vsel %vm1358, %v2832, 0
        %v2872 = vsel %vm1358, %v2833, 0
        %v2875 = vsel %vm1358, %v2834, 0
        %v2878 = vsel %vm1358, %v2835, 0
        %v2881 = vsel %vm1358, %v2836, 0
        %v2884 = vsel %vm1358, %v2837, 0
        %v2887 = vsel %vm1358, %v2838, 0
        %2889 = vmatprep.subr.mxu0 0.0
        %2890 = vmatpush1.xpose.msra.mxu0 %v2887
        %2891 = vmatprep.subr.mxu0 0.0
        %2892 = vmatpush1.xpose.msra.mxu0 %v2884
        %2893 = vmatprep.subr.mxu0 0.0
        %2894 = vmatpush1.xpose.msra.mxu0 %v2881
        %2895 = vmatprep.subr.mxu0 0.0
        %2896 = vmatpush1.xpose.msra.mxu0 %v2878
        %2897 = vmatprep.subr.mxu0 0.0
        %2898 = vmatpush1.xpose.msra.mxu0 %v2875
        %2899 = vmatprep.subr.mxu0 0.0
        %2900 = vmatpush1.xpose.msra.mxu0 %v2872
        %2901 = vmatprep.subr.mxu0 0.0
        %2902 = vmatpush1.xpose.msra.mxu0 %v2869
        %2903 = vmatprep.subr.mxu0 0.0
        %2904 = vmatpush1.xpose.msra.mxu0 %v2866
        %2905 = vmatprep.subr.mxu0 0.0
        %2906 = vmatpush1.xpose.msra.mxu0 %v2863
        %2907 = vmatprep.subr.mxu0 0.0
        %2908 = vmatpush1.xpose.msra.mxu0 %v2860
        %2909 = vmatprep.subr.mxu0 0.0
        %2910 = vmatpush1.xpose.msra.mxu0 %v2857
        %2911 = vmatprep.subr.mxu0 0.0
        %2912 = vmatpush1.xpose.msra.mxu0 %v2854
        %2913 = vmatprep.subr.mxu0 0.0
        %2914 = vmatpush1.xpose.msra.mxu0 %v2851
        %2915 = vmatprep.subr.mxu0 0.0
        %2916 = vmatpush1.xpose.msra.mxu0 %v2848
        %2917 = vmatprep.subr.mxu0 0.0
        %2918 = vmatpush1.xpose.msra.mxu0 %v2845
        %2919 = vmatprep.subr.mxu0 0.0
        %2920 = vmatpush1.xpose.msra.mxu0 %v2842
        %2921 = vmatprep.subr.mxu0 0.0
        %2922 = vmatpush2.xpose.msra.mxu0 0.0
        %2923 = vmatprep.subr.mxu0 0.0
        %2924 = vmatpush2.xpose.msra.mxu0 0.0
        %2925 = vmatprep.subr.mxu0 0.0
        %2926 = vmatpush2.xpose.msra.mxu0 0.0
        %2927 = vmatprep.subr.mxu0 0.0
        %2928 = vmatpush2.xpose.msra.mxu0 0.0
        %2929 = vmatprep.subr.mxu0 0.0
        %2930 = vmatpush2.xpose.msra.mxu0 0.0
        %2931 = vmatprep.subr.mxu0 0.0
        %2932 = vmatpush2.xpose.msra.mxu0 0.0
        %2933 = vmatprep.subr.mxu0 0.0
        %2934 = vmatpush2.xpose.msra.mxu0 0.0
        %2935 = vmatprep.subr.mxu0 0.0
        %2936 = vmatpush2.xpose.msra.mxu0 0.0
        %2937 = vmatprep.subr.mxu0 0.0
        %2938 = vmatpush2.xpose.msra.mxu0 0.0
        %2939 = vmatprep.subr.mxu0 0.0
        %2940 = vmatpush2.xpose.msra.mxu0 0.0
        %2941 = vmatprep.subr.mxu0 0.0
        %2942 = vmatpush2.xpose.msra.mxu0 0.0
        %2943 = vmatprep.subr.mxu0 0.0
        %2944 = vmatpush2.xpose.msra.mxu0 0.0
        %2945 = vmatprep.subr.mxu0 0.0
        %2946 = vmatpush2.xpose.msra.mxu0 0.0
        %2947 = vmatprep.subr.mxu0 0.0
        %2948 = vmatpush2.xpose.msra.mxu0 0.0
        %2949 = vmatprep.subr.mxu0 0.0
        %2950 = vmatpush2.xpose.msra.mxu0 0.0
        %2951 = vmatprep.subr.mxu0 0.0
        %2952 = vmatpush2.xpose.msra.mxu0 0.0
        %2953 = vmatprep.mubr.f32.mxu0 0.0
        %2954 = vmatmul.mubr.f32.gmra.mxu0 %v2839
        %v2955 = vpop.f32.mrf.mxu0
        %v2956 = vadd.f32 0.0, %v2955
        %v2957 = vpop.f32.mrf.mxu0
        %2958 = vdwg.mxu0
        %vm2959 = vcmp.lt.s32.totalorder %v733, 8
        %v2960 = vsel %vm2959, 1, 0
        %vm2961 = vcmp.eq.s32.totalorder %v2960, 1
        %v2962 = vsel %vm2961, %v2457, 1.0
        %v2963 = vmul.f32 %v2956, %v2962
        %v2964 = vld [vmem:[%s4] sm:$0x1]
        %v2966 = vlaneseq
        %v2967 = vshrl.u32 %v2966, 7
        %v2968 = vsub.s32 0, %v2967
        %v2969 = vrot.slane %v2964, %v2968
        %v2971 = vadd.f32 %v2963, %v2969
        %2972 = vst [vmem:[%s207] sm:$0xff] %v2971
        %s2973 = sand.u32 %s122, 1
        %s2974 = scalar_lea.sflag [#allocation6], %s2973
        %s2975 = sand.u32 %s122, 1
        %s2976 = smul.addr %s2975, 8
        %s2977 = scalar_lea.vmem [#allocation5], %s2976
        // Predicated region
        $region37: #{tpu_custom_call.1} parent=35 // pred_check
          %p2978 = pneg %p132
        $region38: #{tpu_custom_call.1} parent=35 // pred_check_branch
          %2980 = sbr.rel (%p2978) target = $region40
        $region39: #{tpu_custom_call.1} parent=35 // pred_region
          %s2982 = ssub.s32 128, 128
          %2983 = vsyncadd %s2974, %s2982
          %s2984 = smul.addr %s20, 128
          %s2985 = scalar_lea.hbm %s5, %s2984
          %s2987 = sshll.u32 %s2977, 4
          %s2988 = int_to_ptr.vmem [resolvable:$true] %s2987
          %2990 = dma.vmem_to_hbm [thread:$0]  %s2988, 128, %s2985, %s2974
        $region40: #{tpu_custom_call.1} parent=35 // pred_fallthru
          _
      $region36: #{tpu_custom_call.1} parent=5 // pred_fallthru
        _
      %p2991 = scmp.le.s32.totalorder 2, %s15
      // Predicated region
      $region41: #{tpu_custom_call.1} parent=5 // pred_check
        %p2992 = pneg %p2991
      $region42: #{tpu_custom_call.1} parent=5 // pred_check_branch
        %2994 = sbr.rel (%p2992) target = $region44
      $region43: #{tpu_custom_call.1} parent=5 // pred_region
        %s2995 = ssub.s32 %s15, 2
        // Predicated region
        $region45: #{tpu_custom_call.1} parent=43 // pred_check
          %p2996 = pneg %p138
        $region46: #{tpu_custom_call.1} parent=43 // pred_check_branch
          %2998 = sbr.rel (%p2996) target = $region48
        $region47: #{tpu_custom_call.1} parent=43 // pred_region
          %s2999 = sand.u32 %s123, 1
          %s3000 = scalar_lea.sflag [#allocation6], %s2999
          %s3001 = sand.u32 %s123, 1
          %s3002 = smul.addr %s3001, 8
          %s3003 = scalar_lea.vmem [#allocation5], %s3002
          %3004 = dma.done %s3000, 128
        $region48: #{tpu_custom_call.1} parent=43 // pred_fallthru
          _
      $region44: #{tpu_custom_call.1} parent=5 // pred_fallthru
        _
    $region6: #{tpu_custom_call.1} parent=1 // loop_footer
      %s19 = sadd.s32 1, %s15
    $region7: #{tpu_custom_call.1} parent=1 // loop_footer_branch
      %14 = sbr.rel target = $region3
    $region8: #{tpu_custom_call.1} parent=1 // loop_exit
      _
    %3005 = vsyncpa [#allocation6], 1
    %s3006 = scalar_lea.sflag [#allocation6], 1
    %3007 = vsyncpa %s3006, 1

</llo_original>
